<compile_context>
chip_gen: v7x
topology: tpu7x:2x2x1
jax: 0.10.0
libtpu: 0.0.40
codegen_flags: <defaults>
</compile_context>

<pallas_src>
import jax
import jax.numpy as jnp
from jax.experimental import pallas as pl
from jax.experimental.pallas import tpu as pltpu


# ----------------------------------------------------------------------------
# Pass 1: fused theta|phi|g projection + 2x2 maxpool (MXU-bound)
# ----------------------------------------------------------------------------
def _proj_pool_kernel(x_ref, w_ref, theta_ref, phi_ref, g_ref):
    """Per (batch, window-chunk) grid step.

    x_ref     : (4, tc, C)  bf16  pixel-major chunk (pixel p of windows j..j+tc)
    w_ref     : (C, CT)     bf16  [w_theta | w_phi | w_g] pre-transposed
    theta_ref : (4, tc, C8) bf16  un-pooled theta projection (per pixel)
    phi_ref   : (tc, C8)    bf16  2x2-maxpooled phi
    g_ref     : (tc, C2)    bf16  2x2-maxpooled g
    """
    c8 = theta_ref.shape[-1]
    pooled = None
    for p in range(4):                                   # static unrolled loop
        proj = jnp.dot(x_ref[p, :, :], w_ref[...],
                       preferred_element_type=jnp.float32)      # (tc, CT) f32
        theta_ref[p, :, :] = proj[:, :c8].astype(jnp.bfloat16)
        pg = proj[:, c8:]                                # phi | g columns
        pooled = pg if pooled is None else jnp.maximum(pooled, pg)
    phi_ref[...] = pooled[:, :c8].astype(jnp.bfloat16)
    g_ref[...] = pooled[:, c8:].astype(jnp.bfloat16)


# ----------------------------------------------------------------------------
# Pass 2: attention (softmax) + output 1x1 conv (EUP/XLU-bound per tile)
# ----------------------------------------------------------------------------
def _attn_kernel(theta_ref, phit_ref, gp_ref, wa_ref, out_ref):
    """Per (batch, query-tile) grid step.

    theta_ref : (tq, C8)  bf16   query projections for this tile
    phit_ref  : (C8, N4)  bf16   pooled phi, pre-transposed (lane-dense logits)
    gp_ref    : (N4, C2)  bf16   pooled g
    wa_ref    : (C2, C)   bf16   sigma * w_attn (pre-transposed, sigma folded)
    out_ref   : (tq, C)   bf16   attention contribution only (residual in XLA)
    """
    # bf16 MXU logits with f32 accumulation (contraction is only C/8 terms).
    s = jnp.dot(theta_ref[...], phit_ref[...],
                preferred_element_type=jnp.float32)              # (tq, N4) f32
    s = s - jnp.max(s, axis=-1, keepdims=True)
    e = jnp.exp(s)                                               # EUP
    # normalize via the EUP approximate reciprocal (frees the VALU slot).
    p = e * pl.reciprocal(jnp.sum(e, axis=-1, keepdims=True), approx=True)

    attn_g = jnp.dot(p.astype(jnp.bfloat16), gp_ref[...],
                     preferred_element_type=jnp.float32)         # (tq, C2)
    out = jnp.dot(attn_g.astype(jnp.bfloat16), wa_ref[...],
                  preferred_element_type=jnp.float32)            # (tq, C)
    out_ref[...] = out.astype(out_ref.dtype)


# ----------------------------------------------------------------------------
# Generation-aware sizing helpers
# ----------------------------------------------------------------------------
def _vmem_limit_bytes():
    """~78% of the local chip's physical VMEM, capped at 100 MiB.
    v5e/v6e (128 MiB) -> 100 MiB; v7x (64 MiB) -> ~50 MiB; fallback is v7x-safe."""
    cap = 64 * 1024 * 1024
    try:
        info = pltpu.get_tpu_info()
        cap = int(getattr(info, "vmem_capacity_bytes", cap))
    except Exception:
        pass
    return int(min(cap * 0.78, 100 * 1024 * 1024))


def _pick_query_tile(n, n4, vmem_limit):
    """Largest tq (multiple of 8 dividing N, capped at 1024) whose live f32
    softmax temporaries (~3 x tq x N4 x 4B) fit in ~1/3 of the VMEM limit."""
    if n % 8 != 0:
        return n                      # tiny/odd N: full-dim block (alignment-exempt)
    budget = vmem_limit // 3
    cap = max(8, min(1024, budget // max(1, 12 * n4)))
    cap -= cap % 8
    cap = max(8, cap)
    if n <= cap:
        return n
    best = 8
    for t in range(8, cap + 1, 8):
        if n % t == 0:
            best = t
    return best


def _pick_window_chunk(n4, c, vmem_limit):
    """Window-chunk for pass 1: multiple of 128 dividing N4 (or N4 itself),
    sized so the double-buffered (4, tc, C) bf16 x-chunk stays within ~1/3 of
    the VMEM limit."""
    budget = vmem_limit // 3
    cap = max(128, budget // max(1, 16 * c))      # 4*tc*C*2B * 2 buffers
    if n4 <= cap:
        return n4
    best = None
    for t in range(128, cap + 1, 128):
        if n4 % t == 0:
            best = t
    return best if best is not None else n4


# ----------------------------------------------------------------------------
# Wrapper
# ----------------------------------------------------------------------------
def midq_self_attn(x_nchw, params):
    """Forward of MidQSelf_Attn. x_nchw: (B, C, H, W) float32 -> (B, C, H, W)."""
    B, C, H, W = x_nchw.shape
    assert C % 32 == 0, "quaternion convs need C, C//8, C//2 divisible by 4"
    assert H % 2 == 0 and W % 2 == 0
    N, N4, C8, C2 = H * W, (H * W) // 4, C // 8, C // 2
    CT = 2 * C8 + C2

    vmem_limit = _vmem_limit_bytes()
    tq = _pick_query_tile(N, N4, vmem_limit)
    tc = _pick_window_chunk(N4, C, vmem_limit)

    # NCHW -> pixel-major channel-last (B, pixel-in-window, window, C): the
    # 2x2 maxpool becomes a max over four CONTIGUOUS row blocks in-kernel.
    x_w = (x_nchw.reshape(B, C, H // 2, 2, W // 2, 2)
           .transpose(0, 3, 5, 2, 4, 1)              # (B, dy, dx, Hh, Wh, C)
           .reshape(B, 4, N4, C)
           .astype(jnp.bfloat16))

    # Lane-dense concatenated projection weight: theta | phi | g in one matmul.
    wcat = jnp.concatenate(
        [params["w_theta"].T, params["w_phi"].T, params["w_g"].T],
        axis=1).astype(jnp.bfloat16)                                  # (C, CT)
    # sigma is a scalar scale on a linear map -> fold it into the output conv.
    wa = (params["sigma"][0] * params["w_attn"].T).astype(jnp.bfloat16)  # (C2, C)

    common_params = dict(
        dimension_semantics=("parallel", "parallel"),
        vmem_limit_bytes=vmem_limit,
    )

    # ---- pass 1: projection + pool ------------------------------------------
    theta4, phi_p, g_p = pl.pallas_call(
        _proj_pool_kernel,
        out_shape=(
            jax.ShapeDtypeStruct((B, 4, N4, C8), jnp.bfloat16),   # theta (per pixel)
            jax.ShapeDtypeStruct((B, N4, C8), jnp.bfloat16),      # pooled phi
            jax.ShapeDtypeStruct((B, N4, C2), jnp.bfloat16),      # pooled g
        ),
        grid=(B, N4 // tc),
        in_specs=[
            pl.BlockSpec((None, 4, tc, C), lambda b, j: (b, 0, j, 0)),
            pl.BlockSpec((C, CT), lambda b, j: (0, 0)),
        ],
        out_specs=(
            pl.BlockSpec((None, 4, tc, C8), lambda b, j: (b, 0, j, 0)),
            pl.BlockSpec((None, tc, C8), lambda b, j: (b, j, 0)),
            pl.BlockSpec((None, tc, C2), lambda b, j: (b, j, 0)),
        ),
        compiler_params=pltpu.CompilerParams(**common_params),
    )(x_w, wcat)

    theta = theta4.reshape(B, N, C8)       # contiguous pixel-major rows (no-op)
    phi_t = jnp.swapaxes(phi_p, 1, 2)      # (B, C8, N4): one tiny transpose/batch

    # ---- pass 2: attention + output conv -------------------------------------
    out_w = pl.pallas_call(
        _attn_kernel,
        out_shape=jax.ShapeDtypeStruct((B, N, C), jnp.bfloat16),
        grid=(B, N // tq),
        in_specs=[
            pl.BlockSpec((None, tq, C8), lambda b, q: (b, q, 0)),
            pl.BlockSpec((None, C8, N4), lambda b, q: (b, 0, 0)),
            pl.BlockSpec((None, N4, C2), lambda b, q: (b, 0, 0)),
            pl.BlockSpec((C2, C), lambda b, q: (0, 0)),
        ],
        out_specs=pl.BlockSpec((None, tq, C), lambda b, q: (b, q, 0)),
        compiler_params=pltpu.CompilerParams(**common_params),
    )(theta, phi_t, g_p, wa)

    # attention contribution (sigma already folded in) back to NCHW; residual
    # add in f32 on the original x (full-precision identity path).
    attn_nchw = (out_w.reshape(B, 2, 2, H // 2, W // 2, C)
                 .transpose(0, 5, 3, 1, 4, 2)          # (B, C, Hh, dy, Wh, dx)
                 .reshape(B, C, H, W)
                 .astype(jnp.float32))
    return x_nchw + attn_nchw


# ----------------------------------------------------------------------------
# Glue: quaternion weight assembly, spectral norm
# ----------------------------------------------------------------------------
def _spectral_normalize(w):
    # PyTorch spectral_norm uses power iteration; its fixed point is sigma_max.
    # We use the exact largest singular value (deterministic, converged).
    return w / jnp.linalg.norm(w, ord=2)


def _quaternion_1x1_weight(key, in_ch, out_ch, use_sn=True):
    """Build the full (out_ch, in_ch) weight of a 1x1 QuaternionConv from its
    r/i/j/k components of shape (out_ch//4, in_ch//4, 1, 1)."""
    ci, co = in_ch // 4, out_ch // 4
    keys = jax.random.split(key, 4)
    comps = [jax.random.normal(k, (co, ci), jnp.float32) / jnp.sqrt(in_ch)
             for k in keys]
    if use_sn:
        comps = [_spectral_normalize(c) for c in comps]
    r, i, j, k = comps
    row_r = jnp.concatenate([r, -i, -j, -k], axis=1)
    row_i = jnp.concatenate([i,  r, -k,  j], axis=1)
    row_j = jnp.concatenate([j,  k,  r, -i], axis=1)
    row_k = jnp.concatenate([k, -j,  i,  r], axis=1)
    return jnp.concatenate([row_r, row_i, row_j, row_k], axis=0)   # (out, in)


# ----------------------------------------------------------------------------
# Pure-JAX f32 reference (mirrors the PyTorch forward, channel-first)
# ----------------------------------------------------------------------------
def _reference(x, params):
    P = jax.lax.Precision.HIGHEST
    B, C, H, W = x.shape

    def conv1x1(t, w):
        return jnp.einsum("oc,bchw->bohw", w, t, precision=P)

    def maxpool(t):
        b, c, h, w = t.shape
        return t.reshape(b, c, h // 2, 2, w // 2, 2).max(axis=(3, 5))

    theta = conv1x1(x, params["w_theta"]).reshape(B, C // 8, H * W)
    phi = maxpool(conv1x1(x, params["w_phi"])).reshape(B, C // 8, H * W // 4)
    attn = jnp.einsum("bcn,bcm->bnm", theta, phi, precision=P)
    attn = jax.nn.softmax(attn, axis=-1)
    g = maxpool(conv1x1(x, params["w_g"])).reshape(B, C // 2, H * W // 4)
    attn_g = jnp.einsum("bcm,bnm->bcn", g, attn, precision=P).reshape(B, C // 2, H, W)
    attn_g = conv1x1(attn_g, params["w_attn"])
    return x + params["sigma"] * attn_g


# ----------------------------------------------------------------------------
if __name__ == "__main__":
    key = jax.random.PRNGKey(0)
    kx, k1, k2, k3, k4 = jax.random.split(key, 5)

    # quaternion constraint: C, C//8, C//2 all divisible by 4  =>  C multiple of 32
    B, C, H, W = 2, 32, 8, 8
    x = jax.random.normal(kx, (B, C, H, W), jnp.float32)

    use_spectral_norm = True
    params = {
        "w_theta": _quaternion_1x1_weight(k1, C, C // 8, use_spectral_norm),
        "w_phi":   _quaternion_1x1_weight(k2, C, C // 8, use_spectral_norm),
        "w_g":     _quaternion_1x1_weight(k3, C, C // 2, use_spectral_norm),
        "w_attn":  _quaternion_1x1_weight(k4, C // 2, C, use_spectral_norm),
        # module __init__ sets sigma = 0; use a nonzero value so the attention
        # path actually contributes to the output in this synthetic test.
        "sigma":   jnp.array([0.3], jnp.float32),
    }

    # The kernel feeds the MXU bf16 operands (f32 accumulation).  Round the
    # test inputs/weights to bf16-representable values so the parity check
    # against the f32 reference isolates kernel correctness from operand
    # quantization noise.
    x = x.astype(jnp.bfloat16).astype(jnp.float32)
    params = {k: (v.astype(jnp.bfloat16).astype(jnp.float32) if k != "sigma" else v)
              for k, v in params.items()}

    fwd = jax.jit(midq_self_attn)
    out = fwd(x, params)
    jax.block_until_ready(out)

    ref = _reference(x, params)
    assert out.shape == (B, C, H, W)
    max_err = float(jnp.max(jnp.abs(out - ref)))
    # Tolerance sized for bf16 theta/phi logits operands (softmax is sensitive
    # to logit rounding where the top-2 logits are nearly tied), bf16 softmax
    # probabilities / values, bf16 output, and the EUP approximate reciprocal.
    assert jnp.allclose(out, ref, rtol=5e-2, atol=5e-2), max_err

    print("KERNEL_OK")
</pallas_src>

<mosaic_0001>
module attributes {stable_mosaic.version = 11 : i64} {
  func.func @_proj_pool_kernel(%arg0: i32, %arg1: i32, %arg2: memref<1x4x16x32xbf16, #tpu.memory_space<vmem>>, %arg3: memref<32x24xbf16, #tpu.memory_space<vmem>>, %arg4: memref<1x4x16x4xbf16, #tpu.memory_space<vmem>>, %arg5: memref<1x16x4xbf16, #tpu.memory_space<vmem>>, %arg6: memref<1x16x16xbf16, #tpu.memory_space<vmem>>) attributes {dimension_semantics = [#tpu.dimension_semantics<parallel>, #tpu.dimension_semantics<parallel>], iteration_bounds = array<i64: 2, 1>, scalar_prefetch = 0 : i64, scratch_operands = 0 : i64, tpu.core_type = #tpu.core_type<tc>, window_params = [{transform_indices = @transform_0, window_bounds = array<i64: 1, 4, 16, 32>}, {pipeline_mode = #tpu.pipeline_mode<synchronous>, transform_indices = @transform_1, window_bounds = array<i64: 32, 24>}, {transform_indices = @transform_2, window_bounds = array<i64: 1, 4, 16, 4>}, {transform_indices = @transform_3, window_bounds = array<i64: 1, 16, 4>}, {transform_indices = @transform_4, window_bounds = array<i64: 1, 16, 16>}]} {
    %c0 = arith.constant 0 : index
    %c0_0 = arith.constant 0 : index
    %c0_1 = arith.constant 0 : index
    %c0_2 = arith.constant 0 : index
    %0 = vector.load %arg2[%c0, %c0_0, %c0_1, %c0_2] : memref<1x4x16x32xbf16, #tpu.memory_space<vmem>>, vector<1x1x16x32xbf16>
    %1 = vector.shape_cast %0 : vector<1x1x16x32xbf16> to vector<16x32xbf16>
    %c0_3 = arith.constant 0 : index
    %c0_4 = arith.constant 0 : index
    %2 = vector.load %arg3[%c0_3, %c0_4] : memref<32x24xbf16, #tpu.memory_space<vmem>>, vector<32x24xbf16>
    %cst = arith.constant dense<0.000000e+00> : vector<16x24xf32>
    %3 = tpu.matmul %1, %2, %cst {dimension_numbers = #tpu.dot_dimension_numbers<[1], [0], [0], [1], [0, 0, 1, 1], [], []>} : vector<16x32xbf16>, vector<32x24xbf16>, vector<16x24xf32> -> vector<16x24xf32>
    %4 = vector.extract_strided_slice %3 {offsets = [0, 0], sizes = [16, 4], strides = [1, 1]} : vector<16x24xf32> to vector<16x4xf32>
    %5 = arith.truncf %4 : vector<16x4xf32> to vector<16x4xbf16>
    %c0_5 = arith.constant 0 : index
    %c0_6 = arith.constant 0 : index
    %c0_7 = arith.constant 0 : index
    %c0_8 = arith.constant 0 : index
    %6 = vector.load %arg4[%c0_5, %c0_6, %c0_7, %c0_8] : memref<1x4x16x4xbf16, #tpu.memory_space<vmem>>, vector<1x1x16x4xbf16>
    %7 = vector.shape_cast %6 : vector<1x1x16x4xbf16> to vector<16x4xbf16>
    %8 = vector.shape_cast %5 : vector<16x4xbf16> to vector<1x1x16x4xbf16>
    tpu.vector_store %arg4[%c0_5, %c0_6, %c0_7, %c0_8], %8 {strides = array<i32>} : memref<1x4x16x4xbf16, #tpu.memory_space<vmem>>, vector<1x1x16x4xbf16>,
    %9 = vector.extract_strided_slice %3 {offsets = [0, 4], sizes = [16, 20], strides = [1, 1]} : vector<16x24xf32> to vector<16x20xf32>
    %c0_9 = arith.constant 0 : index
    %c1 = arith.constant 1 : index
    %c0_10 = arith.constant 0 : index
    %c0_11 = arith.constant 0 : index
    %10 = vector.load %arg2[%c0_9, %c1, %c0_10, %c0_11] : memref<1x4x16x32xbf16, #tpu.memory_space<vmem>>, vector<1x1x16x32xbf16>
    %11 = vector.shape_cast %10 : vector<1x1x16x32xbf16> to vector<16x32xbf16>
    %c0_12 = arith.constant 0 : index
    %c0_13 = arith.constant 0 : index
    %12 = vector.load %arg3[%c0_12, %c0_13] : memref<32x24xbf16, #tpu.memory_space<vmem>>, vector<32x24xbf16>
    %cst_14 = arith.constant dense<0.000000e+00> : vector<16x24xf32>
    %13 = tpu.matmul %11, %12, %cst_14 {dimension_numbers = #tpu.dot_dimension_numbers<[1], [0], [0], [1], [0, 0, 1, 1], [], []>} : vector<16x32xbf16>, vector<32x24xbf16>, vector<16x24xf32> -> vector<16x24xf32>
    %14 = vector.extract_strided_slice %13 {offsets = [0, 0], sizes = [16, 4], strides = [1, 1]} : vector<16x24xf32> to vector<16x4xf32>
    %15 = arith.truncf %14 : vector<16x4xf32> to vector<16x4xbf16>
    %c0_15 = arith.constant 0 : index
    %c1_16 = arith.constant 1 : index
    %c0_17 = arith.constant 0 : index
    %c0_18 = arith.constant 0 : index
    %16 = vector.load %arg4[%c0_15, %c1_16, %c0_17, %c0_18] : memref<1x4x16x4xbf16, #tpu.memory_space<vmem>>, vector<1x1x16x4xbf16>
    %17 = vector.shape_cast %16 : vector<1x1x16x4xbf16> to vector<16x4xbf16>
    %18 = vector.shape_cast %15 : vector<16x4xbf16> to vector<1x1x16x4xbf16>
    tpu.vector_store %arg4[%c0_15, %c1_16, %c0_17, %c0_18], %18 {strides = array<i32>} : memref<1x4x16x4xbf16, #tpu.memory_space<vmem>>, vector<1x1x16x4xbf16>,
    %19 = vector.extract_strided_slice %13 {offsets = [0, 4], sizes = [16, 20], strides = [1, 1]} : vector<16x24xf32> to vector<16x20xf32>
    %20 = arith.maximumf %9, %19 : vector<16x20xf32>
    %c0_19 = arith.constant 0 : index
    %c2 = arith.constant 2 : index
    %c0_20 = arith.constant 0 : index
    %c0_21 = arith.constant 0 : index
    %21 = vector.load %arg2[%c0_19, %c2, %c0_20, %c0_21] : memref<1x4x16x32xbf16, #tpu.memory_space<vmem>>, vector<1x1x16x32xbf16>
    %22 = vector.shape_cast %21 : vector<1x1x16x32xbf16> to vector<16x32xbf16>
    %c0_22 = arith.constant 0 : index
    %c0_23 = arith.constant 0 : index
    %23 = vector.load %arg3[%c0_22, %c0_23] : memref<32x24xbf16, #tpu.memory_space<vmem>>, vector<32x24xbf16>
    %cst_24 = arith.constant dense<0.000000e+00> : vector<16x24xf32>
    %24 = tpu.matmul %22, %23, %cst_24 {dimension_numbers = #tpu.dot_dimension_numbers<[1], [0], [0], [1], [0, 0, 1, 1], [], []>} : vector<16x32xbf16>, vector<32x24xbf16>, vector<16x24xf32> -> vector<16x24xf32>
    %25 = vector.extract_strided_slice %24 {offsets = [0, 0], sizes = [16, 4], strides = [1, 1]} : vector<16x24xf32> to vector<16x4xf32>
    %26 = arith.truncf %25 : vector<16x4xf32> to vector<16x4xbf16>
    %c0_25 = arith.constant 0 : index
    %c2_26 = arith.constant 2 : index
    %c0_27 = arith.constant 0 : index
    %c0_28 = arith.constant 0 : index
    %27 = vector.load %arg4[%c0_25, %c2_26, %c0_27, %c0_28] : memref<1x4x16x4xbf16, #tpu.memory_space<vmem>>, vector<1x1x16x4xbf16>
    %28 = vector.shape_cast %27 : vector<1x1x16x4xbf16> to vector<16x4xbf16>
    %29 = vector.shape_cast %26 : vector<16x4xbf16> to vector<1x1x16x4xbf16>
    tpu.vector_store %arg4[%c0_25, %c2_26, %c0_27, %c0_28], %29 {strides = array<i32>} : memref<1x4x16x4xbf16, #tpu.memory_space<vmem>>, vector<1x1x16x4xbf16>,
    %30 = vector.extract_strided_slice %24 {offsets = [0, 4], sizes = [16, 20], strides = [1, 1]} : vector<16x24xf32> to vector<16x20xf32>
    %31 = arith.maximumf %20, %30 : vector<16x20xf32>
    %c0_29 = arith.constant 0 : index
    %c3 = arith.constant 3 : index
    %c0_30 = arith.constant 0 : index
    %c0_31 = arith.constant 0 : index
    %32 = vector.load %arg2[%c0_29, %c3, %c0_30, %c0_31] : memref<1x4x16x32xbf16, #tpu.memory_space<vmem>>, vector<1x1x16x32xbf16>
    %33 = vector.shape_cast %32 : vector<1x1x16x32xbf16> to vector<16x32xbf16>
    %c0_32 = arith.constant 0 : index
    %c0_33 = arith.constant 0 : index
    %34 = vector.load %arg3[%c0_32, %c0_33] : memref<32x24xbf16, #tpu.memory_space<vmem>>, vector<32x24xbf16>
    %cst_34 = arith.constant dense<0.000000e+00> : vector<16x24xf32>
    %35 = tpu.matmul %33, %34, %cst_34 {dimension_numbers = #tpu.dot_dimension_numbers<[1], [0], [0], [1], [0, 0, 1, 1], [], []>} : vector<16x32xbf16>, vector<32x24xbf16>, vector<16x24xf32> -> vector<16x24xf32>
    %36 = vector.extract_strided_slice %35 {offsets = [0, 0], sizes = [16, 4], strides = [1, 1]} : vector<16x24xf32> to vector<16x4xf32>
    %37 = arith.truncf %36 : vector<16x4xf32> to vector<16x4xbf16>
    %c0_35 = arith.constant 0 : index
    %c3_36 = arith.constant 3 : index
    %c0_37 = arith.constant 0 : index
    %c0_38 = arith.constant 0 : index
    %38 = vector.load %arg4[%c0_35, %c3_36, %c0_37, %c0_38] : memref<1x4x16x4xbf16, #tpu.memory_space<vmem>>, vector<1x1x16x4xbf16>
    %39 = vector.shape_cast %38 : vector<1x1x16x4xbf16> to vector<16x4xbf16>
    %40 = vector.shape_cast %37 : vector<16x4xbf16> to vector<1x1x16x4xbf16>
    tpu.vector_store %arg4[%c0_35, %c3_36, %c0_37, %c0_38], %40 {strides = array<i32>} : memref<1x4x16x4xbf16, #tpu.memory_space<vmem>>, vector<1x1x16x4xbf16>,
    %41 = vector.extract_strided_slice %35 {offsets = [0, 4], sizes = [16, 20], strides = [1, 1]} : vector<16x24xf32> to vector<16x20xf32>
    %42 = arith.maximumf %31, %41 : vector<16x20xf32>
    %43 = vector.extract_strided_slice %42 {offsets = [0, 0], sizes = [16, 4], strides = [1, 1]} : vector<16x20xf32> to vector<16x4xf32>
    %44 = arith.truncf %43 : vector<16x4xf32> to vector<16x4xbf16>
    %c0_39 = arith.constant 0 : index
    %c0_40 = arith.constant 0 : index
    %c0_41 = arith.constant 0 : index
    %45 = vector.load %arg5[%c0_39, %c0_40, %c0_41] : memref<1x16x4xbf16, #tpu.memory_space<vmem>>, vector<1x16x4xbf16>
    %46 = vector.shape_cast %45 : vector<1x16x4xbf16> to vector<16x4xbf16>
    %47 = vector.shape_cast %44 : vector<16x4xbf16> to vector<1x16x4xbf16>
    tpu.vector_store %arg5[%c0_39, %c0_40, %c0_41], %47 {strides = array<i32>} : memref<1x16x4xbf16, #tpu.memory_space<vmem>>, vector<1x16x4xbf16>,
    %48 = vector.extract_strided_slice %42 {offsets = [0, 4], sizes = [16, 16], strides = [1, 1]} : vector<16x20xf32> to vector<16x16xf32>
    %49 = arith.truncf %48 : vector<16x16xf32> to vector<16x16xbf16>
    %c0_42 = arith.constant 0 : index
    %c0_43 = arith.constant 0 : index
    %c0_44 = arith.constant 0 : index
    %50 = vector.load %arg6[%c0_42, %c0_43, %c0_44] : memref<1x16x16xbf16, #tpu.memory_space<vmem>>, vector<1x16x16xbf16>
    %51 = vector.shape_cast %50 : vector<1x16x16xbf16> to vector<16x16xbf16>
    %52 = vector.shape_cast %49 : vector<16x16xbf16> to vector<1x16x16xbf16>
    tpu.vector_store %arg6[%c0_42, %c0_43, %c0_44], %52 {strides = array<i32>} : memref<1x16x16xbf16, #tpu.memory_space<vmem>>, vector<1x16x16xbf16>,
    return
  }
  func.func @transform_0(%arg0: i32, %arg1: i32) -> (i32, i32, i32, i32) {
    %c0_i32 = arith.constant 0 : i32
    %c0_i32_0 = arith.constant 0 : i32
    %c0_i32_1 = arith.constant 0 : i32
    return %arg0, %c0_i32, %arg1, %c0_i32_0 : i32, i32, i32, i32
  }
  func.func @transform_1(%arg0: i32, %arg1: i32) -> (i32, i32) {
    %c0_i32 = arith.constant 0 : i32
    %c0_i32_0 = arith.constant 0 : i32
    %c0_i32_1 = arith.constant 0 : i32
    return %c0_i32, %c0_i32_0 : i32, i32
  }
  func.func @transform_2(%arg0: i32, %arg1: i32) -> (i32, i32, i32, i32) {
    %c0_i32 = arith.constant 0 : i32
    %c0_i32_0 = arith.constant 0 : i32
    %c0_i32_1 = arith.constant 0 : i32
    return %arg0, %c0_i32, %arg1, %c0_i32_0 : i32, i32, i32, i32
  }
  func.func @transform_3(%arg0: i32, %arg1: i32) -> (i32, i32, i32) {
    %c0_i32 = arith.constant 0 : i32
    %c0_i32_0 = arith.constant 0 : i32
    return %arg0, %arg1, %c0_i32 : i32, i32, i32
  }
  func.func @transform_4(%arg0: i32, %arg1: i32) -> (i32, i32, i32) {
    %c0_i32 = arith.constant 0 : i32
    %c0_i32_0 = arith.constant 0 : i32
    return %arg0, %arg1, %c0_i32 : i32, i32, i32
  }
}

module attributes {stable_mosaic.version = 11 : i64} {
  func.func @_attn_kernel(%arg0: i32, %arg1: i32, %arg2: memref<1x64x4xbf16, #tpu.memory_space<vmem>>, %arg3: memref<1x4x16xbf16, #tpu.memory_space<vmem>>, %arg4: memref<1x16x16xbf16, #tpu.memory_space<vmem>>, %arg5: memref<16x32xbf16, #tpu.memory_space<vmem>>, %arg6: memref<1x64x32xbf16, #tpu.memory_space<vmem>>) attributes {dimension_semantics = [#tpu.dimension_semantics<parallel>, #tpu.dimension_semantics<parallel>], iteration_bounds = array<i64: 2, 1>, scalar_prefetch = 0 : i64, scratch_operands = 0 : i64, tpu.core_type = #tpu.core_type<tc>, window_params = [{transform_indices = @transform_0, window_bounds = array<i64: 1, 64, 4>}, {transform_indices = @transform_1, window_bounds = array<i64: 1, 4, 16>}, {transform_indices = @transform_2, window_bounds = array<i64: 1, 16, 16>}, {pipeline_mode = #tpu.pipeline_mode<synchronous>, transform_indices = @transform_3, window_bounds = array<i64: 16, 32>}, {transform_indices = @transform_4, window_bounds = array<i64: 1, 64, 32>}]} {
    %c0 = arith.constant 0 : index
    %c0_0 = arith.constant 0 : index
    %c0_1 = arith.constant 0 : index
    %0 = vector.load %arg2[%c0, %c0_0, %c0_1] : memref<1x64x4xbf16, #tpu.memory_space<vmem>>, vector<1x64x4xbf16>
    %1 = vector.shape_cast %0 : vector<1x64x4xbf16> to vector<64x4xbf16>
    %c0_2 = arith.constant 0 : index
    %c0_3 = arith.constant 0 : index
    %c0_4 = arith.constant 0 : index
    %2 = vector.load %arg3[%c0_2, %c0_3, %c0_4] : memref<1x4x16xbf16, #tpu.memory_space<vmem>>, vector<1x4x16xbf16>
    %3 = vector.shape_cast %2 : vector<1x4x16xbf16> to vector<4x16xbf16>
    %cst = arith.constant dense<0.000000e+00> : vector<64x16xf32>
    %4 = tpu.matmul %1, %3, %cst {dimension_numbers = #tpu.dot_dimension_numbers<[1], [0], [0], [1], [0, 0, 1, 1], [], []>} : vector<64x4xbf16>, vector<4x16xbf16>, vector<64x16xf32> -> vector<64x16xf32>
    %cst_5 = arith.constant dense<0xFF800000> : vector<64xf32>
    %5 = vector.multi_reduction <maximumf>, %4, %cst_5 [1] : vector<64x16xf32> to vector<64xf32>
    %6 = vector.shape_cast %5 : vector<64xf32> to vector<64x1xf32>
    %7 = vector.broadcast %6 : vector<64x1xf32> to vector<64x16xf32>
    %8 = arith.subf %4, %7 : vector<64x16xf32>
    %9 = math.exp %8 : vector<64x16xf32>
    %cst_6 = arith.constant dense<0.000000e+00> : vector<64xf32>
    %10 = vector.multi_reduction <add>, %9, %cst_6 [1] : vector<64x16xf32> to vector<64xf32>
    %11 = vector.shape_cast %10 : vector<64xf32> to vector<64x1xf32>
    %12 = tpu.reciprocal %11 {approx = true} : vector<64x1xf32> -> vector<64x1xf32>
    %13 = vector.broadcast %12 : vector<64x1xf32> to vector<64x16xf32>
    %14 = arith.mulf %9, %13 : vector<64x16xf32>
    %15 = arith.truncf %14 : vector<64x16xf32> to vector<64x16xbf16>
    %c0_7 = arith.constant 0 : index
    %c0_8 = arith.constant 0 : index
    %c0_9 = arith.constant 0 : index
    %16 = vector.load %arg4[%c0_7, %c0_8, %c0_9] : memref<1x16x16xbf16, #tpu.memory_space<vmem>>, vector<1x16x16xbf16>
    %17 = vector.shape_cast %16 : vector<1x16x16xbf16> to vector<16x16xbf16>
    %cst_10 = arith.constant dense<0.000000e+00> : vector<64x16xf32>
    %18 = tpu.matmul %15, %17, %cst_10 {dimension_numbers = #tpu.dot_dimension_numbers<[1], [0], [0], [1], [0, 0, 1, 1], [], []>} : vector<64x16xbf16>, vector<16x16xbf16>, vector<64x16xf32> -> vector<64x16xf32>
    %19 = arith.truncf %18 : vector<64x16xf32> to vector<64x16xbf16>
    %c0_11 = arith.constant 0 : index
    %c0_12 = arith.constant 0 : index
    %20 = vector.load %arg5[%c0_11, %c0_12] : memref<16x32xbf16, #tpu.memory_space<vmem>>, vector<16x32xbf16>
    %cst_13 = arith.constant dense<0.000000e+00> : vector<64x32xf32>
    %21 = tpu.matmul %19, %20, %cst_13 {dimension_numbers = #tpu.dot_dimension_numbers<[1], [0], [0], [1], [0, 0, 1, 1], [], []>} : vector<64x16xbf16>, vector<16x32xbf16>, vector<64x32xf32> -> vector<64x32xf32>
    %22 = arith.truncf %21 : vector<64x32xf32> to vector<64x32xbf16>
    %c0_14 = arith.constant 0 : index
    %c0_15 = arith.constant 0 : index
    %c0_16 = arith.constant 0 : index
    %23 = vector.load %arg6[%c0_14, %c0_15, %c0_16] : memref<1x64x32xbf16, #tpu.memory_space<vmem>>, vector<1x64x32xbf16>
    %24 = vector.shape_cast %23 : vector<1x64x32xbf16> to vector<64x32xbf16>
    %25 = vector.shape_cast %22 : vector<64x32xbf16> to vector<1x64x32xbf16>
    tpu.vector_store %arg6[%c0_14, %c0_15, %c0_16], %25 {strides = array<i32>} : memref<1x64x32xbf16, #tpu.memory_space<vmem>>, vector<1x64x32xbf16>,
    return
  }
  func.func @transform_0(%arg0: i32, %arg1: i32) -> (i32, i32, i32) {
    %c0_i32 = arith.constant 0 : i32
    %c0_i32_0 = arith.constant 0 : i32
    return %arg0, %arg1, %c0_i32 : i32, i32, i32
  }
  func.func @transform_1(%arg0: i32, %arg1: i32) -> (i32, i32, i32) {
    %c0_i32 = arith.constant 0 : i32
    %c0_i32_0 = arith.constant 0 : i32
    %c0_i32_1 = arith.constant 0 : i32
    return %arg0, %c0_i32, %c0_i32_0 : i32, i32, i32
  }
  func.func @transform_2(%arg0: i32, %arg1: i32) -> (i32, i32, i32) {
    %c0_i32 = arith.constant 0 : i32
    %c0_i32_0 = arith.constant 0 : i32
    %c0_i32_1 = arith.constant 0 : i32
    return %arg0, %c0_i32, %c0_i32_0 : i32, i32, i32
  }
  func.func @transform_3(%arg0: i32, %arg1: i32) -> (i32, i32) {
    %c0_i32 = arith.constant 0 : i32
    %c0_i32_0 = arith.constant 0 : i32
    %c0_i32_1 = arith.constant 0 : i32
    return %c0_i32, %c0_i32_0 : i32, i32
  }
  func.func @transform_4(%arg0: i32, %arg1: i32) -> (i32, i32, i32) {
    %c0_i32 = arith.constant 0 : i32
    %c0_i32_0 = arith.constant 0 : i32
    return %arg0, %arg1, %c0_i32 : i32, i32, i32
  }
}

</mosaic_0001>

<llo_original>
// kernel: midq_self_attn.2
$region0: #{midq_self_attn.2}
  #allocation0 [shape = 'u32[]', space=smem, size = 0x4, offset = 0x4, fixed_abs, tag = 'smem constant byte address 0x4 - core index']
  #allocation1 [shape = 'u32[144,128]{1,0:T(1,128)}', space=vmem, size = 0x12000, scoped, tag = 'internal scratch']
  %s0 = inlined_call_operand.vmem [shape: bf16[2,4,16,32], index: 0, kind: input, shape index: {}]
  %s1 = inlined_call_operand.vmem [shape: bf16[32,24], index: 1, kind: input, shape index: {}]
  %s2 = inlined_call_operand.vmem [shape: bf16[2,4,16,4], index: 2, kind: output, shape index: {0}]
  %s3 = inlined_call_operand.vmem [shape: bf16[2,16,4], index: 3, kind: output, shape index: {1}]
  %s4 = inlined_call_operand.vmem [shape: bf16[2,16,16], index: 4, kind: output, shape index: {2}]
  %5 = xla_tuple %s2, %s3, %s4
  %s6 = sld [smem:[#allocation0]]
  $region57: #{midq_self_attn.2} parent=0
    _
  %s8 = ssub.s32 1, %s6
  %s9 = scalar_select 0, %s8, %s6
  loop: start=0, step=1, limit=4
  $region2: #{midq_self_attn.2} parent=0 // loop_pre_header
    _
  $region3: #{midq_self_attn.2} parent=0 // loop_header
    %s11 = sphi 0, %s15
    %p12 = scmp.ge.s32.totalorder %s11, 4
    %s18 = sphi 0, %s30
    %s19 = sphi 0, %s26
    %s20 = sphi 0, %s18
    %s21 = sphi 0, %s19
    %s22 = sphi 0, %s20
    %s23 = sphi 0, %s21
    %s35 = sphi 0, %s37
    %s38 = sphi 0, %s35
    %s39 = sphi 0, %s38
    %s55 = sphi 0, %s39
    %s59 = sphi 0, %s59
    %s61 = sphi 0, %s59
    %s62 = sphi 0, %s61
    %s76 = sphi 0, %s62
    %s84 = sphi 0, %s86
    %s87 = sphi 0, %s84
    %s88 = sphi 0, %s87
    %s104 = sphi 0, %s88
    %s112 = sphi 0, %s114
    %s115 = sphi 0, %s112
    %s116 = sphi 0, %s115
    %s132 = sphi 0, %s116
    %s140 = sphi 0, %s142
    %s143 = sphi 0, %s140
    %s144 = sphi 0, %s143
    %s160 = sphi 0, %s144
  $region4: #{midq_self_attn.2} parent=0 // loop_header_branch
    %14 = sbr.rel (%p12) target = $region8
  $region5: #{midq_self_attn.2} parent=0 // loop_body
    %s16 = ssub.s32 %s11, 1
    %s17 = ssub.s32 %s11, 2
    %s24 = sadd.s32 1, %s19
    %p25 = scmp.ge.s32.totalorder %s24, 1
    %s26 = scalar_select %p25, 0, %s24
    %s27 = sadd.s32 1, %s18
    %s28 = scalar_select %p25, %s27, %s18
    %p29 = scmp.ge.s32.totalorder %s28, 2
    %s30 = scalar_select %p29, 0, %s28
    %s31 = ssub.s32 %s18, %s30
    %s32 = ssub.s32 %s19, %s26
    %s33 = sor.u32 %s31, %s32
    %p34 = scmp.eq.s32.totalorder %s33, 0
    %s36 = sadd.s32 %s35, 1
    %s37 = scalar_select %p34, %s35, %s36
    %p40 = pneg %p34
    %p41 = scmp.eq.s32.totalorder %s11, 1
    %p42 = por %p40, %p41
    %p43 = scmp.ne.s32.totalorder %s35, %s38
    %p44 = scmp.eq.s32.totalorder %s11, 0
    %p45 = por %p43, %p44
    %p46 = scmp.ne.s32.totalorder %s35, %s38
    %p47 = scmp.eq.s32.totalorder %s16, 1
    %p48 = por %p46, %p47
    %p49 = scmp.ne.s32.totalorder %s38, %s39
    %p50 = scmp.eq.s32.totalorder %s16, 0
    %p51 = por %p49, %p50
    %p52 = scmp.ne.s32.totalorder %s38, %s39
    %p53 = scmp.eq.s32.totalorder %s17, 1
    %p54 = por %p52, %p53
    %p56 = scmp.ne.s32.totalorder %s39, %s55
    %p57 = scmp.eq.s32.totalorder %s17, 0
    %p58 = por %p56, %p57
    %s60 = sadd.s32 %s59, 1
    %p63 = scmp.eq.s32.totalorder %s11, 1
    %p64 = scmp.ne.s32.totalorder %s59, %s61
    %p65 = scmp.eq.s32.totalorder %s11, 0
    %p66 = por %p64, %p65
    %p67 = scmp.ne.s32.totalorder %s59, %s61
    %p68 = scmp.eq.s32.totalorder %s16, 1
    %p69 = por %p67, %p68
    %p70 = scmp.ne.s32.totalorder %s61, %s62
    %p71 = scmp.eq.s32.totalorder %s16, 0
    %p72 = por %p70, %p71
    %p73 = scmp.ne.s32.totalorder %s61, %s62
    %p74 = scmp.eq.s32.totalorder %s17, 1
    %p75 = por %p73, %p74
    %p77 = scmp.ne.s32.totalorder %s62, %s76
    %p78 = scmp.eq.s32.totalorder %s17, 0
    %p79 = por %p77, %p78
    %s80 = ssub.s32 %s18, %s30
    %s81 = ssub.s32 %s19, %s26
    %s82 = sor.u32 %s80, %s81
    %p83 = scmp.eq.s32.totalorder %s82, 0
    %s85 = sadd.s32 %s84, 1
    %s86 = scalar_select %p83, %s84, %s85
    %p89 = pneg %p83
    %p90 = scmp.eq.s32.totalorder %s11, 1
    %p91 = por %p89, %p90
    %p92 = scmp.ne.s32.totalorder %s84, %s87
    %p93 = scmp.eq.s32.totalorder %s11, 0
    %p94 = por %p92, %p93
    %p95 = scmp.ne.s32.totalorder %s84, %s87
    %p96 = scmp.eq.s32.totalorder %s16, 1
    %p97 = por %p95, %p96
    %p98 = scmp.ne.s32.totalorder %s87, %s88
    %p99 = scmp.eq.s32.totalorder %s16, 0
    %p100 = por %p98, %p99
    %p101 = scmp.ne.s32.totalorder %s87, %s88
    %p102 = scmp.eq.s32.totalorder %s17, 1
    %p103 = por %p101, %p102
    %p105 = scmp.ne.s32.totalorder %s88, %s104
    %p106 = scmp.eq.s32.totalorder %s17, 0
    %p107 = por %p105, %p106
    %s108 = ssub.s32 %s18, %s30
    %s109 = ssub.s32 %s19, %s26
    %s110 = sor.u32 %s108, %s109
    %p111 = scmp.eq.s32.totalorder %s110, 0
    %s113 = sadd.s32 %s112, 1
    %s114 = scalar_select %p111, %s112, %s113
    %p117 = pneg %p111
    %p118 = scmp.eq.s32.totalorder %s11, 1
    %p119 = por %p117, %p118
    %p120 = scmp.ne.s32.totalorder %s112, %s115
    %p121 = scmp.eq.s32.totalorder %s11, 0
    %p122 = por %p120, %p121
    %p123 = scmp.ne.s32.totalorder %s112, %s115
    %p124 = scmp.eq.s32.totalorder %s16, 1
    %p125 = por %p123, %p124
    %p126 = scmp.ne.s32.totalorder %s115, %s116
    %p127 = scmp.eq.s32.totalorder %s16, 0
    %p128 = por %p126, %p127
    %p129 = scmp.ne.s32.totalorder %s115, %s116
    %p130 = scmp.eq.s32.totalorder %s17, 1
    %p131 = por %p129, %p130
    %p133 = scmp.ne.s32.totalorder %s116, %s132
    %p134 = scmp.eq.s32.totalorder %s17, 0
    %p135 = por %p133, %p134
    %s136 = ssub.s32 %s18, %s30
    %s137 = ssub.s32 %s19, %s26
    %s138 = sor.u32 %s136, %s137
    %p139 = scmp.eq.s32.totalorder %s138, 0
    %s141 = sadd.s32 %s140, 1
    %s142 = scalar_select %p139, %s140, %s141
    %p145 = pneg %p139
    %p146 = scmp.eq.s32.totalorder %s11, 1
    %p147 = por %p145, %p146
    %p148 = scmp.ne.s32.totalorder %s140, %s143
    %p149 = scmp.eq.s32.totalorder %s11, 0
    %p150 = por %p148, %p149
    %p151 = scmp.ne.s32.totalorder %s140, %s143
    %p152 = scmp.eq.s32.totalorder %s16, 1
    %p153 = por %p151, %p152
    %p154 = scmp.ne.s32.totalorder %s143, %s144
    %p155 = scmp.eq.s32.totalorder %s16, 0
    %p156 = por %p154, %p155
    %p157 = scmp.ne.s32.totalorder %s143, %s144
    %p158 = scmp.eq.s32.totalorder %s17, 1
    %p159 = por %p157, %p158
    %p161 = scmp.ne.s32.totalorder %s144, %s160
    %p162 = scmp.eq.s32.totalorder %s17, 0
    %p163 = por %p161, %p162
    %p164 = scmp.le.s32.totalorder 1, %s11
    %p165 = scmp.lt.s32.totalorder %s11, 3
    %p166 = pnand %p164, %p165
    %p167 = pneg %p166
    // Predicated region
    $region9: #{midq_self_attn.2} parent=5 // pred_check
      _
    $region10: #{midq_self_attn.2} parent=5 // pred_check_branch
      %169 = sbr.rel (%p166) target = $region12
    $region11: #{midq_self_attn.2} parent=5 // pred_region
      %s170 = ssub.s32 %s11, 1
      // Predicated region
      $region13: #{midq_self_attn.2} parent=11 // pred_check
        %p171 = pneg %p72
      $region14: #{midq_self_attn.2} parent=11 // pred_check_branch
        %173 = sbr.rel (%p171) target = $region16
      $region15: #{midq_self_attn.2} parent=11 // pred_region
        _
      $region16: #{midq_self_attn.2} parent=11 // pred_fallthru
        _
    $region12: #{midq_self_attn.2} parent=5 // pred_fallthru
      _
    %p174 = scmp.lt.s32.totalorder %s11, 2
    // Predicated region
    $region17: #{midq_self_attn.2} parent=5 // pred_check
      %p175 = pneg %p174
    $region18: #{midq_self_attn.2} parent=5 // pred_check_branch
      %177 = sbr.rel (%p175) target = $region20
    $region19: #{midq_self_attn.2} parent=5 // pred_region
      // Predicated region
      $region21: #{midq_self_attn.2} parent=19 // pred_check
        %p178 = pneg %p45
      $region22: #{midq_self_attn.2} parent=19 // pred_check_branch
        %180 = sbr.rel (%p178) target = $region24
      $region23: #{midq_self_attn.2} parent=19 // pred_region
        %s181 = smul.u32 2, %s19
        %p182 = scmp.lt.s32.totalorder %s18, 1
        %s183 = scalar_select %p182, %s18, 1
        %p184 = scmp.lt.s32.totalorder %s181, 1
        %s185 = scalar_select %p184, %s181, 1
        %s186 = smul.addr %s183, 8
        %s187 = sadd.s32 %s185, %s186
        %s188 = smul.addr %s187, 4
        %s189 = scalar_lea.vmem %s0, %s188
        %s190 = smul.u32 2, %s19
      $region24: #{midq_self_attn.2} parent=19 // pred_fallthru
        _
    $region20: #{midq_self_attn.2} parent=5 // pred_fallthru
      _
    %p191 = scmp.le.s32.totalorder 1, %s11
    %p192 = scmp.lt.s32.totalorder %s11, 3
    %p193 = pnand %p191, %p192
    %p194 = pneg %p193
    // Predicated region
    $region25: #{midq_self_attn.2} parent=5 // pred_check
      _
    $region26: #{midq_self_attn.2} parent=5 // pred_check_branch
      %196 = sbr.rel (%p193) target = $region28
    $region27: #{midq_self_attn.2} parent=5 // pred_region
      %s197 = ssub.s32 %s11, 1
      %s198 = smul.u32 2, %s21
      %p199 = scmp.lt.s32.totalorder %s20, 1
      %s200 = scalar_select %p199, %s20, 1
      %p201 = scmp.lt.s32.totalorder %s198, 1
      %s202 = scalar_select %p201, %s198, 1
      %s203 = smul.addr %s200, 8
      %s204 = sadd.s32 %s202, %s203
      %s205 = smul.addr %s204, 4
      %s206 = scalar_lea.vmem %s0, %s205
      %p207 = pneg %p51
      %p208 = pneg %p48
      %p209 = pneg %p72
      %p210 = pneg %p69
      %p211 = pneg %p100
      %p212 = pneg %p97
      %s213 = smul.u32 2, %s21
      %p214 = scmp.lt.s32.totalorder %s20, 1
      %s215 = scalar_select %p214, %s20, 1
      %p216 = scmp.lt.s32.totalorder %s213, 1
      %s217 = scalar_select %p216, %s213, 1
      %s218 = smul.addr %s215, 8
      %s219 = sadd.s32 %s217, %s218
      %s220 = smul.addr %s219, 4
      %s221 = scalar_lea.vmem %s2, %s220
      %p222 = pneg %p128
      %p223 = pneg %p125
      %s224 = smul.u32 2, %s21
      %p225 = scmp.lt.s32.totalorder %s20, 1
      %s226 = scalar_select %p225, %s20, 1
      %p227 = scmp.lt.s32.totalorder %s224, 1
      %s228 = scalar_select %p227, %s224, 1
      %s229 = smul.addr %s226, 2
      %s230 = sadd.s32 %s228, %s229
      %s231 = smul.addr %s230, 4
      %s232 = scalar_lea.vmem %s3, %s231
      %p233 = pneg %p156
      %p234 = pneg %p153
      %s235 = smul.u32 2, %s21
      %p236 = scmp.lt.s32.totalorder %s20, 1
      %s237 = scalar_select %p236, %s20, 1
      %p238 = scmp.lt.s32.totalorder %s235, 1
      %s239 = scalar_select %p238, %s235, 1
      %s240 = smul.addr %s237, 2
      %s241 = sadd.s32 %s239, %s240
      %s242 = smul.addr %s241, 4
      %s243 = scalar_lea.vmem %s4, %s242
      %s244 = smul.u32 2, %s21
      %p245 = scmp.lt.s32.totalorder %s20, 1
      %s246 = scalar_select %p245, %s20, 1
      %p247 = scmp.lt.s32.totalorder %s244, 1
      %s248 = scalar_select %p247, %s244, 1
      %s249 = smul.addr %s246, 8
      %s250 = sadd.s32 %s248, %s249
      %s251 = smul.addr %s250, 4
      %s252 = scalar_lea.vmem %s0, %s251
      %s253 = smul.u32 2, %s21
      %s254 = smul.u32 2, %s21
      %p255 = scmp.lt.s32.totalorder %s20, 1
      %s256 = scalar_select %p255, %s20, 1
      %p257 = scmp.lt.s32.totalorder %s254, 1
      %s258 = scalar_select %p257, %s254, 1
      %s259 = smul.addr %s256, 8
      %s260 = sadd.s32 %s258, %s259
      %s261 = smul.addr %s260, 4
      %s262 = scalar_lea.vmem %s2, %s261
      %s263 = smul.u32 2, %s21
      %s264 = smul.u32 2, %s21
      %p265 = scmp.lt.s32.totalorder %s20, 1
      %s266 = scalar_select %p265, %s20, 1
      %p267 = scmp.lt.s32.totalorder %s264, 1
      %s268 = scalar_select %p267, %s264, 1
      %s269 = smul.addr %s266, 2
      %s270 = sadd.s32 %s268, %s269
      %s271 = smul.addr %s270, 4
      %s272 = scalar_lea.vmem %s3, %s271
      %s273 = smul.u32 2, %s21
      %s274 = smul.u32 2, %s21
      %p275 = scmp.lt.s32.totalorder %s20, 1
      %s276 = scalar_select %p275, %s20, 1
      %p277 = scmp.lt.s32.totalorder %s274, 1
      %s278 = scalar_select %p277, %s274, 1
      %s279 = smul.addr %s276, 2
      %s280 = sadd.s32 %s278, %s279
      %s281 = smul.addr %s280, 4
      %s282 = scalar_lea.vmem %s4, %s281
      %s283 = smul.u32 2, %s21
      %v285 = vld [vmem:[%s252] sm:$0xf]
      %v286 = vld [vmem:[%s252 + $0x4] sm:$0xf]
      %v287 = vld [vmem:[%s1] sm:$0xf]
      %v288 = vld [vmem:[%s1 + $0x4] sm:$0xf]
      %v289 = vld [vmem:[%s1 + $0x8] sm:$0xf]
      %v290 = vld [vmem:[%s1 + $0xc] sm:$0xf]
      %v293 = vunpack.c.l.b16 %v285
      %v294 = vunpack.c.l.b16 %v286
      %v295 = vpack.c.b16 %v294, %v293
      %v300 = vunpack.c.l.b16 %v287
      %v301 = vunpack.c.l.b16 %v288
      %v302 = vunpack.c.l.b16 %v289
      %v303 = vunpack.c.l.b16 %v290
      %v304 = vpack.c.b16 %v301, %v300
      %v305 = vpack.c.b16 %v303, %v302
      %vm308 = vcmask 261120
      %v310 = vsel %vm308, %v295, 0
      %312 = vmatprep.subr.bf16.mxu0 0
      %313 = vmatpush1.bf16.msra.mxu0 %v304
      %314 = vmatprep.subr.bf16.mxu0 0
      %315 = vmatpush1.bf16.msra.mxu0 %v305
      %316 = vmatprep.subr.bf16.mxu0 0
      %317 = vmatpush1.bf16.msra.mxu0 0
      %318 = vmatprep.subr.bf16.mxu0 0
      %319 = vmatpush1.bf16.msra.mxu0 0
      %320 = vmatprep.subr.bf16.mxu0 0
      %321 = vmatpush1.bf16.msra.mxu0 0
      %322 = vmatprep.subr.bf16.mxu0 0
      %323 = vmatpush1.bf16.msra.mxu0 0
      %324 = vmatprep.subr.bf16.mxu0 0
      %325 = vmatpush1.bf16.msra.mxu0 0
      %326 = vmatprep.subr.bf16.mxu0 0
      %327 = vmatpush1.bf16.msra.mxu0 0
      %328 = vmatprep.subr.bf16.mxu0 0
      %329 = vmatpush1.bf16.msra.mxu0 0
      %330 = vmatprep.subr.bf16.mxu0 0
      %331 = vmatpush1.bf16.msra.mxu0 0
      %332 = vmatprep.subr.bf16.mxu0 0
      %333 = vmatpush1.bf16.msra.mxu0 0
      %334 = vmatprep.subr.bf16.mxu0 0
      %335 = vmatpush1.bf16.msra.mxu0 0
      %336 = vmatprep.subr.bf16.mxu0 0
      %337 = vmatpush1.bf16.msra.mxu0 0
      %338 = vmatprep.subr.bf16.mxu0 0
      %339 = vmatpush1.bf16.msra.mxu0 0
      %340 = vmatprep.subr.bf16.mxu0 0
      %341 = vmatpush1.bf16.msra.mxu0 0
      %342 = vmatprep.subr.bf16.mxu0 0
      %343 = vmatpush1.bf16.msra.mxu0 0
      %344 = vmatprep.mubr.bf16.mxu0 0
      %345 = vmatmul.mubr.bf16.gmra.mrb[0].mxu0 %v310
      %v346 = vpop.f32.mrb[0].mxu0
      %v347 = vadd.f32 0.0, %v346
      %v348 = vpop.f32.mrb[0].mxu0
      %v349 = vpop.f32.mrb[0].mxu0
      %v350 = vadd.f32 0.0, %v349
      %v351 = vpop.f32.mrb[0].mxu0
      %352 = vdwg.mxu0
      %v353 = vpack.c.bf16 %v350, %v347
      %v355 = vunpack.c.l.b16 %v353
      %v356 = vunpack.c.h.b16 %v353
      %v357 = vpack.c.b16 %v355, %v355
      %v358 = vpack.c.b16 %v356, %v356
      %vm361 = vcmask 27648
      %362 = vst.msk [vmem:[%s262] sm:$0xf] %vm361, %v357
      %363 = vst.msk [vmem:[%s262 + $0x4] sm:$0xf] %vm361, %v358
      %s364 = scalar_lea.vmem %s252, 8
      %v365 = vld [vmem:[%s364] sm:$0xf]
      %v366 = vld [vmem:[%s364 + $0x4] sm:$0xf]
      %v367 = vld [vmem:[%s1] sm:$0xf]
      %v368 = vld [vmem:[%s1 + $0x4] sm:$0xf]
      %v369 = vld [vmem:[%s1 + $0x8] sm:$0xf]
      %v370 = vld [vmem:[%s1 + $0xc] sm:$0xf]
      %v373 = vunpack.c.l.b16 %v365
      %v374 = vunpack.c.l.b16 %v366
      %v375 = vpack.c.b16 %v374, %v373
      %v380 = vunpack.c.l.b16 %v367
      %v381 = vunpack.c.l.b16 %v368
      %v382 = vunpack.c.l.b16 %v369
      %v383 = vunpack.c.l.b16 %v370
      %v384 = vpack.c.b16 %v381, %v380
      %v385 = vpack.c.b16 %v383, %v382
      %v389 = vsel %vm308, %v375, 0
      %391 = vmatprep.subr.bf16.mxu0 0
      %392 = vmatpush1.bf16.msra.mxu0 %v384
      %393 = vmatprep.subr.bf16.mxu0 0
      %394 = vmatpush1.bf16.msra.mxu0 %v385
      %395 = vmatprep.subr.bf16.mxu0 0
      %396 = vmatpush1.bf16.msra.mxu0 0
      %397 = vmatprep.subr.bf16.mxu0 0
      %398 = vmatpush1.bf16.msra.mxu0 0
      %399 = vmatprep.subr.bf16.mxu0 0
      %400 = vmatpush1.bf16.msra.mxu0 0
      %401 = vmatprep.subr.bf16.mxu0 0
      %402 = vmatpush1.bf16.msra.mxu0 0
      %403 = vmatprep.subr.bf16.mxu0 0
      %404 = vmatpush1.bf16.msra.mxu0 0
      %405 = vmatprep.subr.bf16.mxu0 0
      %406 = vmatpush1.bf16.msra.mxu0 0
      %407 = vmatprep.subr.bf16.mxu0 0
      %408 = vmatpush1.bf16.msra.mxu0 0
      %409 = vmatprep.subr.bf16.mxu0 0
      %410 = vmatpush1.bf16.msra.mxu0 0
      %411 = vmatprep.subr.bf16.mxu0 0
      %412 = vmatpush1.bf16.msra.mxu0 0
      %413 = vmatprep.subr.bf16.mxu0 0
      %414 = vmatpush1.bf16.msra.mxu0 0
      %415 = vmatprep.subr.bf16.mxu0 0
      %416 = vmatpush1.bf16.msra.mxu0 0
      %417 = vmatprep.subr.bf16.mxu0 0
      %418 = vmatpush1.bf16.msra.mxu0 0
      %419 = vmatprep.subr.bf16.mxu0 0
      %420 = vmatpush1.bf16.msra.mxu0 0
      %421 = vmatprep.subr.bf16.mxu0 0
      %422 = vmatpush1.bf16.msra.mxu0 0
      %423 = vmatprep.mubr.bf16.mxu0 0
      %424 = vmatmul.mubr.bf16.gmra.mrb[0].mxu0 %v389
      %v425 = vpop.f32.mrb[0].mxu0
      %v426 = vadd.f32 0.0, %v425
      %v427 = vpop.f32.mrb[0].mxu0
      %v428 = vpop.f32.mrb[0].mxu0
      %v429 = vadd.f32 0.0, %v428
      %v430 = vpop.f32.mrb[0].mxu0
      %431 = vdwg.mxu0
      %v432 = vpack.c.bf16 %v429, %v426
      %v434 = vunpack.c.l.b16 %v432
      %v435 = vunpack.c.h.b16 %v432
      %v436 = vpack.c.b16 %v434, %v434
      %v437 = vpack.c.b16 %v435, %v435
      %s440 = scalar_lea.vmem %s262, 8
      %441 = vst.msk [vmem:[%s440] sm:$0xf] %vm361, %v436
      %442 = vst.msk [vmem:[%s440 + $0x4] sm:$0xf] %vm361, %v437
      %v443 = vmax.f32 %v347, %v426
      %v444 = vmax.f32 %v350, %v429
      %s445 = scalar_lea.vmem %s252, 16
      %v446 = vld [vmem:[%s445] sm:$0xf]
      %v447 = vld [vmem:[%s445 + $0x4] sm:$0xf]
      %v448 = vld [vmem:[%s1] sm:$0xf]
      %v449 = vld [vmem:[%s1 + $0x4] sm:$0xf]
      %v450 = vld [vmem:[%s1 + $0x8] sm:$0xf]
      %v451 = vld [vmem:[%s1 + $0xc] sm:$0xf]
      %v454 = vunpack.c.l.b16 %v446
      %v455 = vunpack.c.l.b16 %v447
      %v456 = vpack.c.b16 %v455, %v454
      %v461 = vunpack.c.l.b16 %v448
      %v462 = vunpack.c.l.b16 %v449
      %v463 = vunpack.c.l.b16 %v450
      %v464 = vunpack.c.l.b16 %v451
      %v465 = vpack.c.b16 %v462, %v461
      %v466 = vpack.c.b16 %v464, %v463
      %v470 = vsel %vm308, %v456, 0
      %472 = vmatprep.subr.bf16.mxu0 0
      %473 = vmatpush1.bf16.msra.mxu0 %v465
      %474 = vmatprep.subr.bf16.mxu0 0
      %475 = vmatpush1.bf16.msra.mxu0 %v466
      %476 = vmatprep.subr.bf16.mxu0 0
      %477 = vmatpush1.bf16.msra.mxu0 0
      %478 = vmatprep.subr.bf16.mxu0 0
      %479 = vmatpush1.bf16.msra.mxu0 0
      %480 = vmatprep.subr.bf16.mxu0 0
      %481 = vmatpush1.bf16.msra.mxu0 0
      %482 = vmatprep.subr.bf16.mxu0 0
      %483 = vmatpush1.bf16.msra.mxu0 0
      %484 = vmatprep.subr.bf16.mxu0 0
      %485 = vmatpush1.bf16.msra.mxu0 0
      %486 = vmatprep.subr.bf16.mxu0 0
      %487 = vmatpush1.bf16.msra.mxu0 0
      %488 = vmatprep.subr.bf16.mxu0 0
      %489 = vmatpush1.bf16.msra.mxu0 0
      %490 = vmatprep.subr.bf16.mxu0 0
      %491 = vmatpush1.bf16.msra.mxu0 0
      %492 = vmatprep.subr.bf16.mxu0 0
      %493 = vmatpush1.bf16.msra.mxu0 0
      %494 = vmatprep.subr.bf16.mxu0 0
      %495 = vmatpush1.bf16.msra.mxu0 0
      %496 = vmatprep.subr.bf16.mxu0 0
      %497 = vmatpush1.bf16.msra.mxu0 0
      %498 = vmatprep.subr.bf16.mxu0 0
      %499 = vmatpush1.bf16.msra.mxu0 0
      %500 = vmatprep.subr.bf16.mxu0 0
      %501 = vmatpush1.bf16.msra.mxu0 0
      %502 = vmatprep.subr.bf16.mxu0 0
      %503 = vmatpush1.bf16.msra.mxu0 0
      %504 = vmatprep.mubr.bf16.mxu0 0
      %505 = vmatmul.mubr.bf16.gmra.mrb[0].mxu0 %v470
      %v506 = vpop.f32.mrb[0].mxu0
      %v507 = vadd.f32 0.0, %v506
      %v508 = vpop.f32.mrb[0].mxu0
      %v509 = vpop.f32.mrb[0].mxu0
      %v510 = vadd.f32 0.0, %v509
      %v511 = vpop.f32.mrb[0].mxu0
      %512 = vdwg.mxu0
      %v513 = vpack.c.bf16 %v510, %v507
      %v515 = vunpack.c.l.b16 %v513
      %v516 = vunpack.c.h.b16 %v513
      %v517 = vpack.c.b16 %v515, %v515
      %v518 = vpack.c.b16 %v516, %v516
      %s521 = scalar_lea.vmem %s262, 16
      %522 = vst.msk [vmem:[%s521] sm:$0xf] %vm361, %v517
      %523 = vst.msk [vmem:[%s521 + $0x4] sm:$0xf] %vm361, %v518
      %v524 = vmax.f32 %v443, %v507
      %v525 = vmax.f32 %v444, %v510
      %s526 = scalar_lea.vmem %s252, 24
      %v527 = vld [vmem:[%s526] sm:$0xf]
      %v528 = vld [vmem:[%s526 + $0x4] sm:$0xf]
      %v529 = vld [vmem:[%s1] sm:$0xf]
      %v530 = vld [vmem:[%s1 + $0x4] sm:$0xf]
      %v531 = vld [vmem:[%s1 + $0x8] sm:$0xf]
      %v532 = vld [vmem:[%s1 + $0xc] sm:$0xf]
      %v535 = vunpack.c.l.b16 %v527
      %v536 = vunpack.c.l.b16 %v528
      %v537 = vpack.c.b16 %v536, %v535
      %v542 = vunpack.c.l.b16 %v529
      %v543 = vunpack.c.l.b16 %v530
      %v544 = vunpack.c.l.b16 %v531
      %v545 = vunpack.c.l.b16 %v532
      %v546 = vpack.c.b16 %v543, %v542
      %v547 = vpack.c.b16 %v545, %v544
      %v551 = vsel %vm308, %v537, 0
      %553 = vmatprep.subr.bf16.mxu0 0
      %554 = vmatpush1.bf16.msra.mxu0 %v546
      %555 = vmatprep.subr.bf16.mxu0 0
      %556 = vmatpush1.bf16.msra.mxu0 %v547
      %557 = vmatprep.subr.bf16.mxu0 0
      %558 = vmatpush1.bf16.msra.mxu0 0
      %559 = vmatprep.subr.bf16.mxu0 0
      %560 = vmatpush1.bf16.msra.mxu0 0
      %561 = vmatprep.subr.bf16.mxu0 0
      %562 = vmatpush1.bf16.msra.mxu0 0
      %563 = vmatprep.subr.bf16.mxu0 0
      %564 = vmatpush1.bf16.msra.mxu0 0
      %565 = vmatprep.subr.bf16.mxu0 0
      %566 = vmatpush1.bf16.msra.mxu0 0
      %567 = vmatprep.subr.bf16.mxu0 0
      %568 = vmatpush1.bf16.msra.mxu0 0
      %569 = vmatprep.subr.bf16.mxu0 0
      %570 = vmatpush1.bf16.msra.mxu0 0
      %571 = vmatprep.subr.bf16.mxu0 0
      %572 = vmatpush1.bf16.msra.mxu0 0
      %573 = vmatprep.subr.bf16.mxu0 0
      %574 = vmatpush1.bf16.msra.mxu0 0
      %575 = vmatprep.subr.bf16.mxu0 0
      %576 = vmatpush1.bf16.msra.mxu0 0
      %577 = vmatprep.subr.bf16.mxu0 0
      %578 = vmatpush1.bf16.msra.mxu0 0
      %579 = vmatprep.subr.bf16.mxu0 0
      %580 = vmatpush1.bf16.msra.mxu0 0
      %581 = vmatprep.subr.bf16.mxu0 0
      %582 = vmatpush1.bf16.msra.mxu0 0
      %583 = vmatprep.subr.bf16.mxu0 0
      %584 = vmatpush1.bf16.msra.mxu0 0
      %585 = vmatprep.mubr.bf16.mxu0 0
      %586 = vmatmul.mubr.bf16.gmra.mrb[0].mxu0 %v551
      %v587 = vpop.f32.mrb[0].mxu0
      %v588 = vadd.f32 0.0, %v587
      %v589 = vpop.f32.mrb[0].mxu0
      %v590 = vpop.f32.mrb[0].mxu0
      %v591 = vadd.f32 0.0, %v590
      %v592 = vpop.f32.mrb[0].mxu0
      %593 = vdwg.mxu0
      %v594 = vpack.c.bf16 %v591, %v588
      %v596 = vunpack.c.l.b16 %v594
      %v597 = vunpack.c.h.b16 %v594
      %v598 = vpack.c.b16 %v596, %v596
      %v599 = vpack.c.b16 %v597, %v597
      %s602 = scalar_lea.vmem %s262, 24
      %603 = vst.msk [vmem:[%s602] sm:$0xf] %vm361, %v598
      %604 = vst.msk [vmem:[%s602 + $0x4] sm:$0xf] %vm361, %v599
      %v605 = vmax.f32 %v524, %v588
      %v606 = vmax.f32 %v525, %v591
      %v607 = vpack.c.bf16 %v606, %v605
      %v609 = vunpack.c.l.b16 %v607
      %v610 = vunpack.c.h.b16 %v607
      %v611 = vpack.c.b16 %v609, %v609
      %v612 = vpack.c.b16 %v610, %v610
      %613 = vrot.lane.b32.xlu0 %v611, 124
      %v614 = vpop.permute.xlu0 %613
      %615 = vrot.lane.b32.xlu0 %v612, 124
      %v616 = vpop.permute.xlu0 %615
      %619 = vst.msk [vmem:[%s272] sm:$0xf] %vm361, %v614
      %620 = vst.msk [vmem:[%s272 + $0x4] sm:$0xf] %vm361, %v616
      %621 = vrot.lane.b32.xlu0 %v611, 120
      %v622 = vpop.permute.xlu0 %621
      %623 = vrot.lane.b32.xlu0 %v612, 120
      %v624 = vpop.permute.xlu0 %623
      %vm627 = vcmask 125952
      %628 = vst.msk [vmem:[%s282] sm:$0xf] %vm627, %v622
      %629 = vst.msk [vmem:[%s282 + $0x4] sm:$0xf] %vm627, %v624
      %s630 = smul.u32 2, %s21
      %p631 = scmp.lt.s32.totalorder %s20, 1
      %s632 = scalar_select %p631, %s20, 1
      %p633 = scmp.lt.s32.totalorder %s630, 1
      %s634 = scalar_select %p633, %s630, 1
      %s635 = smul.addr %s632, 8
      %s636 = sadd.s32 %s634, %s635
      %s637 = smul.addr %s636, 4
      %s638 = scalar_lea.vmem %s2, %s637
      %s639 = smul.u32 2, %s21
      %p640 = scmp.lt.s32.totalorder %s20, 1
      %s641 = scalar_select %p640, %s20, 1
      %p642 = scmp.lt.s32.totalorder %s639, 1
      %s643 = scalar_select %p642, %s639, 1
      %s644 = smul.addr %s641, 2
      %s645 = sadd.s32 %s643, %s644
      %s646 = smul.addr %s645, 4
      %s647 = scalar_lea.vmem %s3, %s646
      %s648 = smul.u32 2, %s21
      %p649 = scmp.lt.s32.totalorder %s20, 1
      %s650 = scalar_select %p649, %s20, 1
      %p651 = scmp.lt.s32.totalorder %s648, 1
      %s652 = scalar_select %p651, %s648, 1
      %s653 = smul.addr %s650, 2
      %s654 = sadd.s32 %s652, %s653
      %s655 = smul.addr %s654, 4
      %s656 = scalar_lea.vmem %s4, %s655
      // Predicated region
      $region29: #{midq_self_attn.2} parent=27 // pred_check
        %p657 = pneg %p97
      $region30: #{midq_self_attn.2} parent=27 // pred_check_branch
        %659 = sbr.rel (%p657) target = $region32
      $region31: #{midq_self_attn.2} parent=27 // pred_region
        %s660 = smul.u32 2, %s21
      $region32: #{midq_self_attn.2} parent=27 // pred_fallthru
        _
      // Predicated region
      $region33: #{midq_self_attn.2} parent=27 // pred_check
        %p661 = pneg %p125
      $region34: #{midq_self_attn.2} parent=27 // pred_check_branch
        %663 = sbr.rel (%p661) target = $region36
      $region35: #{midq_self_attn.2} parent=27 // pred_region
        %s664 = smul.u32 2, %s21
      $region36: #{midq_self_attn.2} parent=27 // pred_fallthru
        _
      // Predicated region
      $region37: #{midq_self_attn.2} parent=27 // pred_check
        %p665 = pneg %p153
      $region38: #{midq_self_attn.2} parent=27 // pred_check_branch
        %667 = sbr.rel (%p665) target = $region40
      $region39: #{midq_self_attn.2} parent=27 // pred_region
        %s668 = smul.u32 2, %s21
      $region40: #{midq_self_attn.2} parent=27 // pred_fallthru
        _
    $region28: #{midq_self_attn.2} parent=5 // pred_fallthru
      _
    %p669 = scmp.le.s32.totalorder 2, %s11
    // Predicated region
    $region41: #{midq_self_attn.2} parent=5 // pred_check
      %p670 = pneg %p669
    $region42: #{midq_self_attn.2} parent=5 // pred_check_branch
      %672 = sbr.rel (%p670) target = $region44
    $region43: #{midq_self_attn.2} parent=5 // pred_region
      %s673 = ssub.s32 %s11, 2
      // Predicated region
      $region45: #{midq_self_attn.2} parent=43 // pred_check
        %p674 = pneg %p103
      $region46: #{midq_self_attn.2} parent=43 // pred_check_branch
        %676 = sbr.rel (%p674) target = $region48
      $region47: #{midq_self_attn.2} parent=43 // pred_region
        %s677 = smul.u32 2, %s23
        %p678 = scmp.lt.s32.totalorder %s22, 1
        %s679 = scalar_select %p678, %s22, 1
        %p680 = scmp.lt.s32.totalorder %s677, 1
        %s681 = scalar_select %p680, %s677, 1
        %s682 = smul.addr %s679, 8
        %s683 = sadd.s32 %s681, %s682
        %s684 = smul.addr %s683, 4
        %s685 = scalar_lea.vmem %s2, %s684
      $region48: #{midq_self_attn.2} parent=43 // pred_fallthru
        _
      // Predicated region
      $region49: #{midq_self_attn.2} parent=43 // pred_check
        %p686 = pneg %p131
      $region50: #{midq_self_attn.2} parent=43 // pred_check_branch
        %688 = sbr.rel (%p686) target = $region52
      $region51: #{midq_self_attn.2} parent=43 // pred_region
        %s689 = smul.u32 2, %s23
        %p690 = scmp.lt.s32.totalorder %s22, 1
        %s691 = scalar_select %p690, %s22, 1
        %p692 = scmp.lt.s32.totalorder %s689, 1
        %s693 = scalar_select %p692, %s689, 1
        %s694 = smul.addr %s691, 2
        %s695 = sadd.s32 %s693, %s694
        %s696 = smul.addr %s695, 4
        %s697 = scalar_lea.vmem %s3, %s696
      $region52: #{midq_self_attn.2} parent=43 // pred_fallthru
        _
      // Predicated region
      $region53: #{midq_self_attn.2} parent=43 // pred_check
        %p698 = pneg %p159
      $region54: #{midq_self_attn.2} parent=43 // pred_check_branch
        %700 = sbr.rel (%p698) target = $region56
      $region55: #{midq_self_attn.2} parent=43 // pred_region
        %s701 = smul.u32 2, %s23
        %p702 = scmp.lt.s32.totalorder %s22, 1
        %s703 = scalar_select %p702, %s22, 1
        %p704 = scmp.lt.s32.totalorder %s701, 1
        %s705 = scalar_select %p704, %s701, 1
        %s706 = smul.addr %s703, 2
        %s707 = sadd.s32 %s705, %s706
        %s708 = smul.addr %s707, 4
        %s709 = scalar_lea.vmem %s4, %s708
      $region56: #{midq_self_attn.2} parent=43 // pred_fallthru
        _
    $region44: #{midq_self_attn.2} parent=5 // pred_fallthru
      _
  $region6: #{midq_self_attn.2} parent=0 // loop_footer
    %s15 = sadd.s32 1, %s11
  $region7: #{midq_self_attn.2} parent=0 // loop_footer_branch
    %10 = sbr.rel target = $region3
  $region8: #{midq_self_attn.2} parent=0 // loop_exit
    _

// kernel: midq_self_attn.3
$region0: #{midq_self_attn.3}
  #allocation0 [shape = 'u32[]', space=smem, size = 0x4, offset = 0x4, fixed_abs, tag = 'smem constant byte address 0x4 - core index']
  #allocation1 [shape = 'u32[144,128]{1,0:T(1,128)}', space=vmem, size = 0x12000, scoped, tag = 'internal scratch']
  %s0 = inlined_call_operand.vmem [shape: bf16[2,64,4], index: 0, kind: input, shape index: {}]
  %s1 = inlined_call_operand.vmem [shape: bf16[2,4,16], index: 1, kind: input, shape index: {}]
  %s2 = inlined_call_operand.vmem [shape: bf16[2,16,16], index: 2, kind: input, shape index: {}]
  %s3 = inlined_call_operand.vmem [shape: bf16[16,32], index: 3, kind: input, shape index: {}]
  %s4 = inlined_call_operand.vmem [shape: bf16[2,64,32], index: 4, kind: output, shape index: {}]
  %s5 = sld [smem:[#allocation0]]
  $region49: #{midq_self_attn.3} parent=0
    _
  %s7 = ssub.s32 1, %s5
  %s8 = scalar_select 0, %s7, %s5
  loop: start=0, step=1, limit=4
  $region2: #{midq_self_attn.3} parent=0 // loop_pre_header
    _
  $region3: #{midq_self_attn.3} parent=0 // loop_header
    %s10 = sphi 0, %s14
    %p11 = scmp.ge.s32.totalorder %s10, 4
    %s17 = sphi 0, %s29
    %s18 = sphi 0, %s25
    %s19 = sphi 0, %s17
    %s20 = sphi 0, %s18
    %s21 = sphi 0, %s19
    %s22 = sphi 0, %s20
    %s34 = sphi 0, %s36
    %s37 = sphi 0, %s34
    %s38 = sphi 0, %s37
    %s54 = sphi 0, %s38
    %s60 = sphi 0, %s62
    %s63 = sphi 0, %s60
    %s64 = sphi 0, %s63
    %s80 = sphi 0, %s64
    %s86 = sphi 0, %s88
    %s89 = sphi 0, %s86
    %s90 = sphi 0, %s89
    %s106 = sphi 0, %s90
    %s110 = sphi 0, %s110
    %s112 = sphi 0, %s110
    %s113 = sphi 0, %s112
    %s127 = sphi 0, %s113
    %s135 = sphi 0, %s137
    %s138 = sphi 0, %s135
    %s139 = sphi 0, %s138
    %s155 = sphi 0, %s139
  $region4: #{midq_self_attn.3} parent=0 // loop_header_branch
    %13 = sbr.rel (%p11) target = $region8
  $region5: #{midq_self_attn.3} parent=0 // loop_body
    %s15 = ssub.s32 %s10, 1
    %s16 = ssub.s32 %s10, 2
    %s23 = sadd.s32 1, %s18
    %p24 = scmp.ge.s32.totalorder %s23, 1
    %s25 = scalar_select %p24, 0, %s23
    %s26 = sadd.s32 1, %s17
    %s27 = scalar_select %p24, %s26, %s17
    %p28 = scmp.ge.s32.totalorder %s27, 2
    %s29 = scalar_select %p28, 0, %s27
    %s30 = ssub.s32 %s17, %s29
    %s31 = ssub.s32 %s18, %s25
    %s32 = sor.u32 %s30, %s31
    %p33 = scmp.eq.s32.totalorder %s32, 0
    %s35 = sadd.s32 %s34, 1
    %s36 = scalar_select %p33, %s34, %s35
    %p39 = pneg %p33
    %p40 = scmp.eq.s32.totalorder %s10, 1
    %p41 = por %p39, %p40
    %p42 = scmp.ne.s32.totalorder %s34, %s37
    %p43 = scmp.eq.s32.totalorder %s10, 0
    %p44 = por %p42, %p43
    %p45 = scmp.ne.s32.totalorder %s34, %s37
    %p46 = scmp.eq.s32.totalorder %s15, 1
    %p47 = por %p45, %p46
    %p48 = scmp.ne.s32.totalorder %s37, %s38
    %p49 = scmp.eq.s32.totalorder %s15, 0
    %p50 = por %p48, %p49
    %p51 = scmp.ne.s32.totalorder %s37, %s38
    %p52 = scmp.eq.s32.totalorder %s16, 1
    %p53 = por %p51, %p52
    %p55 = scmp.ne.s32.totalorder %s38, %s54
    %p56 = scmp.eq.s32.totalorder %s16, 0
    %p57 = por %p55, %p56
    %s58 = ssub.s32 %s17, %s29
    %p59 = scmp.eq.s32.totalorder %s58, 0
    %s61 = sadd.s32 %s60, 1
    %s62 = scalar_select %p59, %s60, %s61
    %p65 = pneg %p59
    %p66 = scmp.eq.s32.totalorder %s10, 1
    %p67 = por %p65, %p66
    %p68 = scmp.ne.s32.totalorder %s60, %s63
    %p69 = scmp.eq.s32.totalorder %s10, 0
    %p70 = por %p68, %p69
    %p71 = scmp.ne.s32.totalorder %s60, %s63
    %p72 = scmp.eq.s32.totalorder %s15, 1
    %p73 = por %p71, %p72
    %p74 = scmp.ne.s32.totalorder %s63, %s64
    %p75 = scmp.eq.s32.totalorder %s15, 0
    %p76 = por %p74, %p75
    %p77 = scmp.ne.s32.totalorder %s63, %s64
    %p78 = scmp.eq.s32.totalorder %s16, 1
    %p79 = por %p77, %p78
    %p81 = scmp.ne.s32.totalorder %s64, %s80
    %p82 = scmp.eq.s32.totalorder %s16, 0
    %p83 = por %p81, %p82
    %s84 = ssub.s32 %s17, %s29
    %p85 = scmp.eq.s32.totalorder %s84, 0
    %s87 = sadd.s32 %s86, 1
    %s88 = scalar_select %p85, %s86, %s87
    %p91 = pneg %p85
    %p92 = scmp.eq.s32.totalorder %s10, 1
    %p93 = por %p91, %p92
    %p94 = scmp.ne.s32.totalorder %s86, %s89
    %p95 = scmp.eq.s32.totalorder %s10, 0
    %p96 = por %p94, %p95
    %p97 = scmp.ne.s32.totalorder %s86, %s89
    %p98 = scmp.eq.s32.totalorder %s15, 1
    %p99 = por %p97, %p98
    %p100 = scmp.ne.s32.totalorder %s89, %s90
    %p101 = scmp.eq.s32.totalorder %s15, 0
    %p102 = por %p100, %p101
    %p103 = scmp.ne.s32.totalorder %s89, %s90
    %p104 = scmp.eq.s32.totalorder %s16, 1
    %p105 = por %p103, %p104
    %p107 = scmp.ne.s32.totalorder %s90, %s106
    %p108 = scmp.eq.s32.totalorder %s16, 0
    %p109 = por %p107, %p108
    %s111 = sadd.s32 %s110, 1
    %p114 = scmp.eq.s32.totalorder %s10, 1
    %p115 = scmp.ne.s32.totalorder %s110, %s112
    %p116 = scmp.eq.s32.totalorder %s10, 0
    %p117 = por %p115, %p116
    %p118 = scmp.ne.s32.totalorder %s110, %s112
    %p119 = scmp.eq.s32.totalorder %s15, 1
    %p120 = por %p118, %p119
    %p121 = scmp.ne.s32.totalorder %s112, %s113
    %p122 = scmp.eq.s32.totalorder %s15, 0
    %p123 = por %p121, %p122
    %p124 = scmp.ne.s32.totalorder %s112, %s113
    %p125 = scmp.eq.s32.totalorder %s16, 1
    %p126 = por %p124, %p125
    %p128 = scmp.ne.s32.totalorder %s113, %s127
    %p129 = scmp.eq.s32.totalorder %s16, 0
    %p130 = por %p128, %p129
    %s131 = ssub.s32 %s17, %s29
    %s132 = ssub.s32 %s18, %s25
    %s133 = sor.u32 %s131, %s132
    %p134 = scmp.eq.s32.totalorder %s133, 0
    %s136 = sadd.s32 %s135, 1
    %s137 = scalar_select %p134, %s135, %s136
    %p140 = pneg %p134
    %p141 = scmp.eq.s32.totalorder %s10, 1
    %p142 = por %p140, %p141
    %p143 = scmp.ne.s32.totalorder %s135, %s138
    %p144 = scmp.eq.s32.totalorder %s10, 0
    %p145 = por %p143, %p144
    %p146 = scmp.ne.s32.totalorder %s135, %s138
    %p147 = scmp.eq.s32.totalorder %s15, 1
    %p148 = por %p146, %p147
    %p149 = scmp.ne.s32.totalorder %s138, %s139
    %p150 = scmp.eq.s32.totalorder %s15, 0
    %p151 = por %p149, %p150
    %p152 = scmp.ne.s32.totalorder %s138, %s139
    %p153 = scmp.eq.s32.totalorder %s16, 1
    %p154 = por %p152, %p153
    %p156 = scmp.ne.s32.totalorder %s139, %s155
    %p157 = scmp.eq.s32.totalorder %s16, 0
    %p158 = por %p156, %p157
    %p159 = scmp.le.s32.totalorder 1, %s10
    %p160 = scmp.lt.s32.totalorder %s10, 3
    %p161 = pnand %p159, %p160
    %p162 = pneg %p161
    // Predicated region
    $region9: #{midq_self_attn.3} parent=5 // pred_check
      _
    $region10: #{midq_self_attn.3} parent=5 // pred_check_branch
      %164 = sbr.rel (%p161) target = $region12
    $region11: #{midq_self_attn.3} parent=5 // pred_region
      %s165 = ssub.s32 %s10, 1
      // Predicated region
      $region13: #{midq_self_attn.3} parent=11 // pred_check
        %p166 = pneg %p123
      $region14: #{midq_self_attn.3} parent=11 // pred_check_branch
        %168 = sbr.rel (%p166) target = $region16
      $region15: #{midq_self_attn.3} parent=11 // pred_region
        _
      $region16: #{midq_self_attn.3} parent=11 // pred_fallthru
        _
    $region12: #{midq_self_attn.3} parent=5 // pred_fallthru
      _
    %p169 = scmp.lt.s32.totalorder %s10, 2
    // Predicated region
    $region17: #{midq_self_attn.3} parent=5 // pred_check
      %p170 = pneg %p169
    $region18: #{midq_self_attn.3} parent=5 // pred_check_branch
      %172 = sbr.rel (%p170) target = $region20
    $region19: #{midq_self_attn.3} parent=5 // pred_region
      // Predicated region
      $region21: #{midq_self_attn.3} parent=19 // pred_check
        %p173 = pneg %p44
      $region22: #{midq_self_attn.3} parent=19 // pred_check_branch
        %175 = sbr.rel (%p173) target = $region24
      $region23: #{midq_self_attn.3} parent=19 // pred_region
        %s176 = smul.u32 8, %s18
        %p177 = scmp.lt.s32.totalorder %s17, 1
        %s178 = scalar_select %p177, %s17, 1
        %p179 = scmp.lt.s32.totalorder %s176, 7
        %s180 = scalar_select %p179, %s176, 7
        %s181 = smul.addr %s178, 8
        %s182 = sadd.s32 %s180, %s181
        %s183 = smul.addr %s182, 4
        %s184 = scalar_lea.vmem %s0, %s183
        %s185 = smul.u32 8, %s18
      $region24: #{midq_self_attn.3} parent=19 // pred_fallthru
        _
      // Predicated region
      $region25: #{midq_self_attn.3} parent=19 // pred_check
        %p186 = pneg %p70
      $region26: #{midq_self_attn.3} parent=19 // pred_check_branch
        %188 = sbr.rel (%p186) target = $region28
      $region27: #{midq_self_attn.3} parent=19 // pred_region
        %p189 = scmp.lt.s32.totalorder %s17, 1
        %s190 = scalar_select %p189, %s17, 1
        %s191 = smul.addr %s190, 2
        %s192 = scalar_lea.vmem %s1, %s191
      $region28: #{midq_self_attn.3} parent=19 // pred_fallthru
        _
      // Predicated region
      $region29: #{midq_self_attn.3} parent=19 // pred_check
        %p193 = pneg %p96
      $region30: #{midq_self_attn.3} parent=19 // pred_check_branch
        %195 = sbr.rel (%p193) target = $region32
      $region31: #{midq_self_attn.3} parent=19 // pred_region
        %p196 = scmp.lt.s32.totalorder %s17, 1
        %s197 = scalar_select %p196, %s17, 1
        %s198 = smul.addr %s197, 2
        %s199 = smul.addr %s198, 4
        %s200 = scalar_lea.vmem %s2, %s199
      $region32: #{midq_self_attn.3} parent=19 // pred_fallthru
        _
    $region20: #{midq_self_attn.3} parent=5 // pred_fallthru
      _
    %p201 = scmp.le.s32.totalorder 1, %s10
    %p202 = scmp.lt.s32.totalorder %s10, 3
    %p203 = pnand %p201, %p202
    %p204 = pneg %p203
    // Predicated region
    $region33: #{midq_self_attn.3} parent=5 // pred_check
      _
    $region34: #{midq_self_attn.3} parent=5 // pred_check_branch
      %206 = sbr.rel (%p203) target = $region36
    $region35: #{midq_self_attn.3} parent=5 // pred_region
      %s207 = ssub.s32 %s10, 1
      %s208 = smul.u32 8, %s20
      %p209 = scmp.lt.s32.totalorder %s19, 1
      %s210 = scalar_select %p209, %s19, 1
      %p211 = scmp.lt.s32.totalorder %s208, 7
      %s212 = scalar_select %p211, %s208, 7
      %s213 = smul.addr %s210, 8
      %s214 = sadd.s32 %s212, %s213
      %s215 = smul.addr %s214, 4
      %s216 = scalar_lea.vmem %s0, %s215
      %p217 = pneg %p50
      %p218 = pneg %p47
      %p219 = scmp.lt.s32.totalorder %s19, 1
      %s220 = scalar_select %p219, %s19, 1
      %s221 = smul.addr %s220, 2
      %s222 = scalar_lea.vmem %s1, %s221
      %p223 = pneg %p76
      %p224 = pneg %p73
      %p225 = scmp.lt.s32.totalorder %s19, 1
      %s226 = scalar_select %p225, %s19, 1
      %s227 = smul.addr %s226, 2
      %s228 = smul.addr %s227, 4
      %s229 = scalar_lea.vmem %s2, %s228
      %p230 = pneg %p102
      %p231 = pneg %p99
      %p232 = pneg %p123
      %p233 = pneg %p120
      %p234 = pneg %p151
      %p235 = pneg %p148
      %s236 = smul.u32 8, %s20
      %p237 = scmp.lt.s32.totalorder %s19, 1
      %s238 = scalar_select %p237, %s19, 1
      %p239 = scmp.lt.s32.totalorder %s236, 7
      %s240 = scalar_select %p239, %s236, 7
      %s241 = smul.addr %s238, 8
      %s242 = sadd.s32 %s240, %s241
      %s243 = smul.addr %s242, 4
      %s244 = scalar_lea.vmem %s4, %s243
      %s245 = smul.u32 8, %s20
      %p246 = scmp.lt.s32.totalorder %s19, 1
      %s247 = scalar_select %p246, %s19, 1
      %p248 = scmp.lt.s32.totalorder %s245, 7
      %s249 = scalar_select %p248, %s245, 7
      %s250 = smul.addr %s247, 8
      %s251 = sadd.s32 %s249, %s250
      %s252 = smul.addr %s251, 4
      %s253 = scalar_lea.vmem %s0, %s252
      %s254 = smul.u32 8, %s20
      %p255 = scmp.lt.s32.totalorder %s19, 1
      %s256 = scalar_select %p255, %s19, 1
      %s257 = smul.addr %s256, 2
      %s258 = scalar_lea.vmem %s1, %s257
      %p259 = scmp.lt.s32.totalorder %s19, 1
      %s260 = scalar_select %p259, %s19, 1
      %s261 = smul.addr %s260, 2
      %s262 = smul.addr %s261, 4
      %s263 = scalar_lea.vmem %s2, %s262
      %s264 = smul.u32 8, %s20
      %p265 = scmp.lt.s32.totalorder %s19, 1
      %s266 = scalar_select %p265, %s19, 1
      %p267 = scmp.lt.s32.totalorder %s264, 7
      %s268 = scalar_select %p267, %s264, 7
      %s269 = smul.addr %s266, 8
      %s270 = sadd.s32 %s268, %s269
      %s271 = smul.addr %s270, 4
      %s272 = scalar_lea.vmem %s4, %s271
      %s273 = smul.u32 8, %s20
      %v275 = vld [vmem:[%s253] sm:$0xf]
      %v276 = vld [vmem:[%s253 + $0x4] sm:$0xf]
      %v277 = vld [vmem:[%s253 + $0x8] sm:$0xf]
      %v278 = vld [vmem:[%s253 + $0xc] sm:$0xf]
      %v279 = vld [vmem:[%s253 + $0x10] sm:$0xf]
      %v280 = vld [vmem:[%s253 + $0x14] sm:$0xf]
      %v281 = vld [vmem:[%s253 + $0x18] sm:$0xf]
      %v282 = vld [vmem:[%s253 + $0x1c] sm:$0xf]
      %v283 = vld [vmem:[%s258] sm:$0x3]
      %v292 = vunpack.c.l.b16 %v275
      %v293 = vunpack.c.l.b16 %v276
      %v294 = vunpack.c.l.b16 %v277
      %v295 = vunpack.c.l.b16 %v278
      %v296 = vunpack.c.l.b16 %v279
      %v297 = vunpack.c.l.b16 %v280
      %v298 = vunpack.c.l.b16 %v281
      %v299 = vunpack.c.l.b16 %v282
      %v300 = vpack.c.b16 %v293, %v292
      %v301 = vpack.c.b16 %v295, %v294
      %v302 = vpack.c.b16 %v297, %v296
      %v303 = vpack.c.b16 %v299, %v298
      %vm304 = vcmask 31744
      %v306 = vsel %vm304, %v300, 0
      %v309 = vsel %vm304, %v301, 0
      %v312 = vsel %vm304, %v302, 0
      %v315 = vsel %vm304, %v303, 0
      %vm317 = vcmask 1041408
      %v319 = vsel %vm317, %v283, 0
      %321 = vmatprep.subr.bf16.mxu0 0
      %322 = vmatpush1.bf16.msra.mxu0 %v319
      %323 = vmatprep.subr.bf16.mxu0 0
      %324 = vmatpush1.bf16.msra.mxu0 0
      %325 = vmatprep.subr.bf16.mxu0 0
      %326 = vmatpush1.bf16.msra.mxu0 0
      %327 = vmatprep.subr.bf16.mxu0 0
      %328 = vmatpush1.bf16.msra.mxu0 0
      %329 = vmatprep.subr.bf16.mxu0 0
      %330 = vmatpush1.bf16.msra.mxu0 0
      %331 = vmatprep.subr.bf16.mxu0 0
      %332 = vmatpush1.bf16.msra.mxu0 0
      %333 = vmatprep.subr.bf16.mxu0 0
      %334 = vmatpush1.bf16.msra.mxu0 0
      %335 = vmatprep.subr.bf16.mxu0 0
      %336 = vmatpush1.bf16.msra.mxu0 0
      %337 = vmatprep.subr.bf16.mxu0 0
      %338 = vmatpush1.bf16.msra.mxu0 0
      %339 = vmatprep.subr.bf16.mxu0 0
      %340 = vmatpush1.bf16.msra.mxu0 0
      %341 = vmatprep.subr.bf16.mxu0 0
      %342 = vmatpush1.bf16.msra.mxu0 0
      %343 = vmatprep.subr.bf16.mxu0 0
      %344 = vmatpush1.bf16.msra.mxu0 0
      %345 = vmatprep.subr.bf16.mxu0 0
      %346 = vmatpush1.bf16.msra.mxu0 0
      %347 = vmatprep.subr.bf16.mxu0 0
      %348 = vmatpush1.bf16.msra.mxu0 0
      %349 = vmatprep.subr.bf16.mxu0 0
      %350 = vmatpush1.bf16.msra.mxu0 0
      %351 = vmatprep.subr.bf16.mxu0 0
      %352 = vmatpush1.bf16.msra.mxu0 0
      %353 = vmatprep.mubr.bf16.mxu0 0
      %354 = vmatmul.mubr.bf16.gmra.mrb[0].mxu0 %v306
      %v355 = vpop.f32.mrb[0].mxu0
      %v356 = vadd.f32 0.0, %v355
      %v357 = vpop.f32.mrb[0].mxu0
      %v358 = vpop.f32.mrb[0].mxu0
      %v359 = vadd.f32 0.0, %v358
      %v360 = vpop.f32.mrb[0].mxu0
      %361 = vmatprep.mubr.bf16.mxu0 0
      %362 = vmatmul.mubr.bf16.gmra.mrb[0].mxu0 %v309
      %v363 = vpop.f32.mrb[0].mxu0
      %v364 = vadd.f32 0.0, %v363
      %v365 = vpop.f32.mrb[0].mxu0
      %v366 = vpop.f32.mrb[0].mxu0
      %v367 = vadd.f32 0.0, %v366
      %v368 = vpop.f32.mrb[0].mxu0
      %369 = vmatprep.mubr.bf16.mxu0 0
      %370 = vmatmul.mubr.bf16.gmra.mrb[0].mxu0 %v312
      %v371 = vpop.f32.mrb[0].mxu0
      %v372 = vadd.f32 0.0, %v371
      %v373 = vpop.f32.mrb[0].mxu0
      %v374 = vpop.f32.mrb[0].mxu0
      %v375 = vadd.f32 0.0, %v374
      %v376 = vpop.f32.mrb[0].mxu0
      %377 = vmatprep.mubr.bf16.mxu0 0
      %378 = vmatmul.mubr.bf16.gmra.mrb[0].mxu0 %v315
      %v379 = vpop.f32.mrb[0].mxu0
      %v380 = vadd.f32 0.0, %v379
      %v381 = vpop.f32.mrb[0].mxu0
      %v382 = vpop.f32.mrb[0].mxu0
      %v383 = vadd.f32 0.0, %v382
      %v384 = vpop.f32.mrb[0].mxu0
      %385 = vdwg.mxu0
      %vm386 = vcmask 130048
      %v387 = vsel %vm386, %v356, -inf
      %388 = vmax.xlane.f32.xlu0 %v387
      %v389 = vpop.xlane.xlu0 %388
      %v390 = vsel %vm386, %v359, -inf
      %391 = vmax.xlane.f32.xlu0 %v390
      %v392 = vpop.xlane.xlu0 %391
      %v393 = vsel %vm386, %v364, -inf
      %394 = vmax.xlane.f32.xlu0 %v393
      %v395 = vpop.xlane.xlu0 %394
      %v396 = vsel %vm386, %v367, -inf
      %397 = vmax.xlane.f32.xlu0 %v396
      %v398 = vpop.xlane.xlu0 %397
      %v399 = vsel %vm386, %v372, -inf
      %400 = vmax.xlane.f32.xlu0 %v399
      %v401 = vpop.xlane.xlu0 %400
      %v402 = vsel %vm386, %v375, -inf
      %403 = vmax.xlane.f32.xlu0 %v402
      %v404 = vpop.xlane.xlu0 %403
      %v405 = vsel %vm386, %v380, -inf
      %406 = vmax.xlane.f32.xlu0 %v405
      %v407 = vpop.xlane.xlu0 %406
      %v408 = vsel %vm386, %v383, -inf
      %409 = vmax.xlane.f32.xlu0 %v408
      %v410 = vpop.xlane.xlu0 %409
      %v411 = vsub.f32 %v356, %v389
      %v412 = vsub.f32 %v359, %v392
      %v413 = vsub.f32 %v364, %v395
      %v414 = vsub.f32 %v367, %v398
      %v415 = vsub.f32 %v372, %v401
      %v416 = vsub.f32 %v375, %v404
      %v417 = vsub.f32 %v380, %v407
      %v418 = vsub.f32 %v383, %v410
      %v419 = vmul.f32 %v411, 1.442695
      %v420 = vpow.pop %v419
      %v421 = vmul.f32 %v412, 1.442695
      %v422 = vpow.pop %v421
      %v423 = vmul.f32 %v413, 1.442695
      %v424 = vpow.pop %v423
      %v425 = vmul.f32 %v414, 1.442695
      %v426 = vpow.pop %v425
      %v427 = vmul.f32 %v415, 1.442695
      %v428 = vpow.pop %v427
      %v429 = vmul.f32 %v416, 1.442695
      %v430 = vpow.pop %v429
      %v431 = vmul.f32 %v417, 1.442695
      %v432 = vpow.pop %v431
      %v433 = vmul.f32 %v418, 1.442695
      %v434 = vpow.pop %v433
      %v435 = vsel %vm386, %v420, 0.0
      %436 = vadd.xlane.f32.xlu0 %v435
      %v437 = vpop.xlane.xlu0 %436
      %v438 = vsel %vm386, %v422, 0.0
      %439 = vadd.xlane.f32.xlu0 %v438
      %v440 = vpop.xlane.xlu0 %439
      %v441 = vsel %vm386, %v424, 0.0
      %442 = vadd.xlane.f32.xlu0 %v441
      %v443 = vpop.xlane.xlu0 %442
      %v444 = vsel %vm386, %v426, 0.0
      %445 = vadd.xlane.f32.xlu0 %v444
      %v446 = vpop.xlane.xlu0 %445
      %v447 = vsel %vm386, %v428, 0.0
      %448 = vadd.xlane.f32.xlu0 %v447
      %v449 = vpop.xlane.xlu0 %448
      %v450 = vsel %vm386, %v430, 0.0
      %451 = vadd.xlane.f32.xlu0 %v450
      %v452 = vpop.xlane.xlu0 %451
      %v453 = vsel %vm386, %v432, 0.0
      %454 = vadd.xlane.f32.xlu0 %v453
      %v455 = vpop.xlane.xlu0 %454
      %v456 = vsel %vm386, %v434, 0.0
      %457 = vadd.xlane.f32.xlu0 %v456
      %v458 = vpop.xlane.xlu0 %457
      %v459 = vrcp.pop %v437
      %v460 = vrcp.pop %v440
      %v461 = vrcp.pop %v443
      %v462 = vrcp.pop %v446
      %v463 = vrcp.pop %v449
      %v464 = vrcp.pop %v452
      %v465 = vrcp.pop %v455
      %v466 = vrcp.pop %v458
      %v467 = vmul.f32 %v420, %v459
      %v468 = vmul.f32 %v422, %v460
      %v469 = vmul.f32 %v424, %v461
      %v470 = vmul.f32 %v426, %v462
      %v471 = vmul.f32 %v428, %v463
      %v472 = vmul.f32 %v430, %v464
      %v473 = vmul.f32 %v432, %v465
      %v474 = vmul.f32 %v434, %v466
      %v475 = vpack.c.bf16 %v468, %v467
      %v476 = vpack.c.bf16 %v470, %v469
      %v477 = vpack.c.bf16 %v472, %v471
      %v478 = vpack.c.bf16 %v474, %v473
      %v479 = vld [vmem:[%s263] sm:$0xf]
      %v480 = vld [vmem:[%s263 + $0x4] sm:$0xf]
      %v483 = vunpack.c.l.b16 %v479
      %v484 = vunpack.c.l.b16 %v480
      %v485 = vpack.c.b16 %v484, %v483
      %v488 = vsel %vm386, %v475, 0
      %v491 = vsel %vm386, %v476, 0
      %v494 = vsel %vm386, %v477, 0
      %v497 = vsel %vm386, %v478, 0
      %499 = vmatprep.subr.bf16.mxu0 0
      %500 = vmatpush1.bf16.msra.mxu0 %v485
      %501 = vmatprep.subr.bf16.mxu0 0
      %502 = vmatpush1.bf16.msra.mxu0 0
      %503 = vmatprep.subr.bf16.mxu0 0
      %504 = vmatpush1.bf16.msra.mxu0 0
      %505 = vmatprep.subr.bf16.mxu0 0
      %506 = vmatpush1.bf16.msra.mxu0 0
      %507 = vmatprep.subr.bf16.mxu0 0
      %508 = vmatpush1.bf16.msra.mxu0 0
      %509 = vmatprep.subr.bf16.mxu0 0
      %510 = vmatpush1.bf16.msra.mxu0 0
      %511 = vmatprep.subr.bf16.mxu0 0
      %512 = vmatpush1.bf16.msra.mxu0 0
      %513 = vmatprep.subr.bf16.mxu0 0
      %514 = vmatpush1.bf16.msra.mxu0 0
      %515 = vmatprep.subr.bf16.mxu0 0
      %516 = vmatpush1.bf16.msra.mxu0 0
      %517 = vmatprep.subr.bf16.mxu0 0
      %518 = vmatpush1.bf16.msra.mxu0 0
      %519 = vmatprep.subr.bf16.mxu0 0
      %520 = vmatpush1.bf16.msra.mxu0 0
      %521 = vmatprep.subr.bf16.mxu0 0
      %522 = vmatpush1.bf16.msra.mxu0 0
      %523 = vmatprep.subr.bf16.mxu0 0
      %524 = vmatpush1.bf16.msra.mxu0 0
      %525 = vmatprep.subr.bf16.mxu0 0
      %526 = vmatpush1.bf16.msra.mxu0 0
      %527 = vmatprep.subr.bf16.mxu0 0
      %528 = vmatpush1.bf16.msra.mxu0 0
      %529 = vmatprep.subr.bf16.mxu0 0
      %530 = vmatpush1.bf16.msra.mxu0 0
      %531 = vmatprep.mubr.bf16.mxu0 0
      %532 = vmatmul.mubr.bf16.gmra.mrb[0].mxu0 %v488
      %v533 = vpop.f32.mrb[0].mxu0
      %v534 = vadd.f32 0.0, %v533
      %v535 = vpop.f32.mrb[0].mxu0
      %v536 = vpop.f32.mrb[0].mxu0
      %v537 = vadd.f32 0.0, %v536
      %v538 = vpop.f32.mrb[0].mxu0
      %539 = vmatprep.mubr.bf16.mxu0 0
      %540 = vmatmul.mubr.bf16.gmra.mrb[0].mxu0 %v491
      %v541 = vpop.f32.mrb[0].mxu0
      %v542 = vadd.f32 0.0, %v541
      %v543 = vpop.f32.mrb[0].mxu0
      %v544 = vpop.f32.mrb[0].mxu0
      %v545 = vadd.f32 0.0, %v544
      %v546 = vpop.f32.mrb[0].mxu0
      %547 = vmatprep.mubr.bf16.mxu0 0
      %548 = vmatmul.mubr.bf16.gmra.mrb[0].mxu0 %v494
      %v549 = vpop.f32.mrb[0].mxu0
      %v550 = vadd.f32 0.0, %v549
      %v551 = vpop.f32.mrb[0].mxu0
      %v552 = vpop.f32.mrb[0].mxu0
      %v553 = vadd.f32 0.0, %v552
      %v554 = vpop.f32.mrb[0].mxu0
      %555 = vmatprep.mubr.bf16.mxu0 0
      %556 = vmatmul.mubr.bf16.gmra.mrb[0].mxu0 %v497
      %v557 = vpop.f32.mrb[0].mxu0
      %v558 = vadd.f32 0.0, %v557
      %v559 = vpop.f32.mrb[0].mxu0
      %v560 = vpop.f32.mrb[0].mxu0
      %v561 = vadd.f32 0.0, %v560
      %v562 = vpop.f32.mrb[0].mxu0
      %563 = vdwg.mxu0
      %v564 = vpack.c.bf16 %v537, %v534
      %v565 = vpack.c.bf16 %v545, %v542
      %v566 = vpack.c.bf16 %v553, %v550
      %v567 = vpack.c.bf16 %v561, %v558
      %v568 = vld [vmem:[%s3] sm:$0xf]
      %v569 = vld [vmem:[%s3 + $0x4] sm:$0xf]
      %v572 = vunpack.c.l.b16 %v568
      %v573 = vunpack.c.l.b16 %v569
      %v574 = vpack.c.b16 %v573, %v572
      %v577 = vsel %vm386, %v564, 0
      %v580 = vsel %vm386, %v565, 0
      %v583 = vsel %vm386, %v566, 0
      %v586 = vsel %vm386, %v567, 0
      %588 = vmatprep.subr.bf16.mxu0 0
      %589 = vmatpush1.bf16.msra.mxu0 %v574
      %590 = vmatprep.subr.bf16.mxu0 0
      %591 = vmatpush1.bf16.msra.mxu0 0
      %592 = vmatprep.subr.bf16.mxu0 0
      %593 = vmatpush1.bf16.msra.mxu0 0
      %594 = vmatprep.subr.bf16.mxu0 0
      %595 = vmatpush1.bf16.msra.mxu0 0
      %596 = vmatprep.subr.bf16.mxu0 0
      %597 = vmatpush1.bf16.msra.mxu0 0
      %598 = vmatprep.subr.bf16.mxu0 0
      %599 = vmatpush1.bf16.msra.mxu0 0
      %600 = vmatprep.subr.bf16.mxu0 0
      %601 = vmatpush1.bf16.msra.mxu0 0
      %602 = vmatprep.subr.bf16.mxu0 0
      %603 = vmatpush1.bf16.msra.mxu0 0
      %604 = vmatprep.subr.bf16.mxu0 0
      %605 = vmatpush1.bf16.msra.mxu0 0
      %606 = vmatprep.subr.bf16.mxu0 0
      %607 = vmatpush1.bf16.msra.mxu0 0
      %608 = vmatprep.subr.bf16.mxu0 0
      %609 = vmatpush1.bf16.msra.mxu0 0
      %610 = vmatprep.subr.bf16.mxu0 0
      %611 = vmatpush1.bf16.msra.mxu0 0
      %612 = vmatprep.subr.bf16.mxu0 0
      %613 = vmatpush1.bf16.msra.mxu0 0
      %614 = vmatprep.subr.bf16.mxu0 0
      %615 = vmatpush1.bf16.msra.mxu0 0
      %616 = vmatprep.subr.bf16.mxu0 0
      %617 = vmatpush1.bf16.msra.mxu0 0
      %618 = vmatprep.subr.bf16.mxu0 0
      %619 = vmatpush1.bf16.msra.mxu0 0
      %620 = vmatprep.mubr.bf16.mxu0 0
      %621 = vmatmul.mubr.bf16.gmra.mrb[0].mxu0 %v577
      %v622 = vpop.f32.mrb[0].mxu0
      %v623 = vadd.f32 0.0, %v622
      %v624 = vpop.f32.mrb[0].mxu0
      %v625 = vpop.f32.mrb[0].mxu0
      %v626 = vadd.f32 0.0, %v625
      %v627 = vpop.f32.mrb[0].mxu0
      %628 = vmatprep.mubr.bf16.mxu0 0
      %629 = vmatmul.mubr.bf16.gmra.mrb[0].mxu0 %v580
      %v630 = vpop.f32.mrb[0].mxu0
      %v631 = vadd.f32 0.0, %v630
      %v632 = vpop.f32.mrb[0].mxu0
      %v633 = vpop.f32.mrb[0].mxu0
      %v634 = vadd.f32 0.0, %v633
      %v635 = vpop.f32.mrb[0].mxu0
      %636 = vmatprep.mubr.bf16.mxu0 0
      %637 = vmatmul.mubr.bf16.gmra.mrb[0].mxu0 %v583
      %v638 = vpop.f32.mrb[0].mxu0
      %v639 = vadd.f32 0.0, %v638
      %v640 = vpop.f32.mrb[0].mxu0
      %v641 = vpop.f32.mrb[0].mxu0
      %v642 = vadd.f32 0.0, %v641
      %v643 = vpop.f32.mrb[0].mxu0
      %644 = vmatprep.mubr.bf16.mxu0 0
      %645 = vmatmul.mubr.bf16.gmra.mrb[0].mxu0 %v586
      %v646 = vpop.f32.mrb[0].mxu0
      %v647 = vadd.f32 0.0, %v646
      %v648 = vpop.f32.mrb[0].mxu0
      %v649 = vpop.f32.mrb[0].mxu0
      %v650 = vadd.f32 0.0, %v649
      %v651 = vpop.f32.mrb[0].mxu0
      %652 = vdwg.mxu0
      %v653 = vpack.c.bf16 %v626, %v623
      %v654 = vpack.c.bf16 %v634, %v631
      %v655 = vpack.c.bf16 %v642, %v639
      %v656 = vpack.c.bf16 %v650, %v647
      %v661 = vunpack.c.l.b16 %v653
      %v662 = vunpack.c.h.b16 %v653
      %v663 = vunpack.c.l.b16 %v654
      %v664 = vunpack.c.h.b16 %v654
      %v665 = vunpack.c.l.b16 %v655
      %v666 = vunpack.c.h.b16 %v655
      %v667 = vunpack.c.l.b16 %v656
      %v668 = vunpack.c.h.b16 %v656
      %v669 = vpack.c.b16 %v661, %v661
      %v670 = vpack.c.b16 %v662, %v662
      %v671 = vpack.c.b16 %v663, %v663
      %v672 = vpack.c.b16 %v664, %v664
      %v673 = vpack.c.b16 %v665, %v665
      %v674 = vpack.c.b16 %v666, %v666
      %v675 = vpack.c.b16 %v667, %v667
      %v676 = vpack.c.b16 %v668, %v668
      %vm685 = vcmask 257024
      %686 = vst.msk [vmem:[%s272] sm:$0xf] %vm685, %v669
      %687 = vst.msk [vmem:[%s272 + $0x4] sm:$0xf] %vm685, %v670
      %688 = vst.msk [vmem:[%s272 + $0x8] sm:$0xf] %vm685, %v671
      %689 = vst.msk [vmem:[%s272 + $0xc] sm:$0xf] %vm685, %v672
      %690 = vst.msk [vmem:[%s272 + $0x10] sm:$0xf] %vm685, %v673
      %691 = vst.msk [vmem:[%s272 + $0x14] sm:$0xf] %vm685, %v674
      %692 = vst.msk [vmem:[%s272 + $0x18] sm:$0xf] %vm685, %v675
      %693 = vst.msk [vmem:[%s272 + $0x1c] sm:$0xf] %vm685, %v676
      %s694 = smul.u32 8, %s20
      %p695 = scmp.lt.s32.totalorder %s19, 1
      %s696 = scalar_select %p695, %s19, 1
      %p697 = scmp.lt.s32.totalorder %s694, 7
      %s698 = scalar_select %p697, %s694, 7
      %s699 = smul.addr %s696, 8
      %s700 = sadd.s32 %s698, %s699
      %s701 = smul.addr %s700, 4
      %s702 = scalar_lea.vmem %s4, %s701
      // Predicated region
      $region37: #{midq_self_attn.3} parent=35 // pred_check
        %p703 = pneg %p148
      $region38: #{midq_self_attn.3} parent=35 // pred_check_branch
        %705 = sbr.rel (%p703) target = $region40
      $region39: #{midq_self_attn.3} parent=35 // pred_region
        %s706 = smul.u32 8, %s20
      $region40: #{midq_self_attn.3} parent=35 // pred_fallthru
        _
    $region36: #{midq_self_attn.3} parent=5 // pred_fallthru
      _
    %p707 = scmp.le.s32.totalorder 2, %s10
    // Predicated region
    $region41: #{midq_self_attn.3} parent=5 // pred_check
      %p708 = pneg %p707
    $region42: #{midq_self_attn.3} parent=5 // pred_check_branch
      %710 = sbr.rel (%p708) target = $region44
    $region43: #{midq_self_attn.3} parent=5 // pred_region
      %s711 = ssub.s32 %s10, 2
      // Predicated region
      $region45: #{midq_self_attn.3} parent=43 // pred_check
        %p712 = pneg %p154
      $region46: #{midq_self_attn.3} parent=43 // pred_check_branch
        %714 = sbr.rel (%p712) target = $region48
      $region47: #{midq_self_attn.3} parent=43 // pred_region
        %s715 = smul.u32 8, %s22
        %p716 = scmp.lt.s32.totalorder %s21, 1
        %s717 = scalar_select %p716, %s21, 1
        %p718 = scmp.lt.s32.totalorder %s715, 7
        %s719 = scalar_select %p718, %s715, 7
        %s720 = smul.addr %s717, 8
        %s721 = sadd.s32 %s719, %s720
        %s722 = smul.addr %s721, 4
        %s723 = scalar_lea.vmem %s4, %s722
      $region48: #{midq_self_attn.3} parent=43 // pred_fallthru
        _
    $region44: #{midq_self_attn.3} parent=5 // pred_fallthru
      _
  $region6: #{midq_self_attn.3} parent=0 // loop_footer
    %s14 = sadd.s32 1, %s10
  $region7: #{midq_self_attn.3} parent=0 // loop_footer_branch
    %9 = sbr.rel target = $region3
  $region8: #{midq_self_attn.3} parent=0 // loop_exit
    _

</llo_original>
